<compile_context>
chip_gen: v7x
topology: tpu7x:2x2x1
jax: 0.10.0
libtpu: 0.0.40
codegen_flags: <defaults>
</compile_context>

<pallas_src>
import functools

import jax
import jax.numpy as jnp
from jax import lax
from jax.experimental import pallas as pl
from jax.experimental.pallas import tpu as pltpu

# ----- config (matches RotNavierModelSimple defaults; L_max is forced to 1) --
L_MAX = 1
NUM_REP = 16
R_DIM = 16
NUM_LAYERS = 5
N_SCALARS = 32
TIME_SLIZE = 4
FEAT_DIM = N_SCALARS + NUM_REP * L_MAX * 2      # 64
HID = FEAT_DIM * 3                              # 192
NEG_SLOPE = 0.01                                # torch F.leaky_relu default
LN_EPS = 1e-5

AUX_W = 8                                       # [R00 R01 R10 R11 u_last v0 v1 pad]
OUT_W = 128                                     # lane-dense output slab width


def leaky_relu(x):
    return jnp.where(x > 0, x, NEG_SLOPE * x)


# ---------------------------------------------------------------------------
# Pallas kernel: fused SO2LayerNorm + SO2OutU + SO2OutV + residuals
# ---------------------------------------------------------------------------
def _fused_heads_kernel(x_ref, aux_ref, w1a_ref, w1b_ref, b1_ref, w2_ref,
                        b2_ref, o_ref):
    x = x_ref[...].astype(jnp.float32)            # (TN, 64)  [scal|rot0|rot1]
    aux = aux_ref[...]                            # (TN, 8)   f32 exact
    r00 = aux[:, 0:1]
    r01 = aux[:, 1:2]
    r10 = aux[:, 2:3]
    r11 = aux[:, 3:4]
    u_last = aux[:, 4:5]
    v_last0 = aux[:, 5:6]
    v_last1 = aux[:, 6:7]

    lane = lax.broadcasted_iota(jnp.int32, (1, FEAT_DIM), 1)
    is_scal = lane < N_SCALARS
    is_m0 = jnp.logical_and(lane >= N_SCALARS, lane < N_SCALARS + NUM_REP)
    scal_mask = is_scal.astype(jnp.float32)
    rot_mask = 1.0 - scal_mask

    # --- fused SO2LayerNorm, in lane place (no slicing) ----------------------
    # scalar LayerNorm stats over lanes [0, 32)
    mu = jnp.sum(x * scal_mask, axis=1, keepdims=True) * (1.0 / N_SCALARS)
    cen = x - mu
    var = jnp.sum(cen * cen * scal_mask, axis=1, keepdims=True) * (1.0 / N_SCALARS)
    inv_std = lax.rsqrt(var + LN_EPS)
    # RMS of rep norms over lanes [32, 64)
    ss = jnp.sum(x * x * rot_mask, axis=1, keepdims=True) * (1.0 / NUM_REP)
    inv_rms = lax.rsqrt(ss + LN_EPS)
    # gains (ln_g / ln_rg) and ln_b are pre-folded into W1A/W1B/b1 at pack time
    xn = jnp.where(is_scal, cen * inv_std, x * inv_rms)            # (TN, 64)

    # --- inverse irrep rotation folded into the first matmul -----------------
    # y0 = x0*R00 + x1*R01 , y1 = x0*R10 + x1*R11; the R-weighted copies are
    # built by pure per-lane scaling (no cross-lane moves) and contracted
    # against W1A / W1B whose m-row blocks are duplicated accordingly.
    ca = jnp.where(is_scal, 1.0, jnp.where(is_m0, r00, r01))
    cb = jnp.where(is_scal, 0.0, jnp.where(is_m0, r10, r11))
    feat_a = (xn * ca).astype(jnp.bfloat16)
    feat_b = (xn * cb).astype(jnp.bfloat16)

    h = (jnp.dot(feat_a, w1a_ref[...], preferred_element_type=jnp.float32)
         + jnp.dot(feat_b, w1b_ref[...], preferred_element_type=jnp.float32)
         + b1_ref[...])
    h = jnp.where(h > 0, h, NEG_SLOPE * h)        # f32 elementwise (v5e-safe)

    out = jnp.dot(h.astype(jnp.bfloat16), w2_ref[...],
                  preferred_element_type=jnp.float32) + b2_ref[...]  # (TN, 128)

    # --- SO2OutV output rotation + residuals (f32 exact) ---------------------
    u_fin = out[:, 0:1] + u_last
    vp0 = out[:, 1:2]
    vp1 = out[:, 2:3]
    v0 = vp0 * r00 + vp1 * r10 + v_last0
    v1 = vp0 * r01 + vp1 * r11 + v_last1

    # single dense (TN, 128) store: [u | v0 | v1 | 0 ...]
    olane = lax.broadcasted_iota(jnp.int32, (1, OUT_W), 1)
    o_ref[...] = jnp.where(olane == 0, u_fin,
                 jnp.where(olane == 1, v0,
                 jnp.where(olane == 2, v1, 0.0)))


# ---------------------------------------------------------------------------
# One-time weight packing (hoisted out of the per-forward path)
# ---------------------------------------------------------------------------
def pack_head_params(params):
    """Fold LN gains/bias into the head weights and pad W2/b2 lane-dense."""
    gain = jnp.concatenate([params["ln_g"], params["ln_rg"], params["ln_rg"]])  # (64,)

    def expand(W1):   # (64, HID) -> A/B row layouts with gains folded
        Wg = W1 * gain[:, None]
        m0 = Wg[N_SCALARS:N_SCALARS + NUM_REP]
        m1 = Wg[N_SCALARS + NUM_REP:]
        WA = jnp.concatenate([Wg[0:N_SCALARS], m0, m0], axis=0)
        WB = jnp.concatenate([jnp.zeros((N_SCALARS, W1.shape[1]), W1.dtype), m1, m1],
                             axis=0)
        return WA, WB

    W1A_u, W1B_u = expand(params["W1u"])
    W1A_v, W1B_v = expand(params["W1v"])
    W1A = jnp.concatenate([W1A_u, W1A_v], axis=1)            # (64, 384)
    W1B = jnp.concatenate([W1B_u, W1B_v], axis=1)            # (64, 384)

    # scalar LayerNorm bias contribution: ln_b @ W1_scalar_rows folded into b1
    b1u = params["b1u"] + params["ln_b"] @ params["W1u"][0:N_SCALARS]
    b1v = params["b1v"] + params["ln_b"] @ params["W1v"][0:N_SCALARS]
    b1 = jnp.concatenate([b1u, b1v])[None]                   # (1, 384)

    # lane-dense second matmul: pad output columns to 128
    W2 = jnp.zeros((2 * HID, OUT_W), jnp.float32)
    W2 = W2.at[:HID, 0:1].set(params["W2u"])
    W2 = W2.at[HID:, 1:3].set(params["W2v"])
    b2 = jnp.zeros((1, OUT_W), jnp.float32)
    b2 = b2.at[0, 0:1].set(params["b2u"])
    b2 = b2.at[0, 1:3].set(params["b2v"])

    return {"W1A": W1A.astype(jnp.bfloat16), "W1B": W1B.astype(jnp.bfloat16),
            "b1": b1.astype(jnp.float32),
            "W2": W2.astype(jnp.bfloat16), "b2": b2.astype(jnp.float32)}


def _choose_tile_n(n):
    # biggest tile (HBM roofline likes 512-1024 rows) that still yields >= 2
    # grid steps when N allows, so v7x's two TensorCores both get work and
    # small N is not padded 2x.
    for t in (1024, 512, 256, 128):
        if n >= 2 * t:
            return t
    return 128


def so2_heads_fused(scal_pre, rot_pre, rot_theta, u_last, v_last, packed, *,
                    tile_n=None):
    """Fused LN + SO2OutU + SO2OutV + residuals.

    scal_pre: (N, 32) pre-LN scalars;  rot_pre: (N, num_rep, 2) pre-LN rot
    features;  rot_theta: (N, L_max, 2, 2);  u_last: (N,);  v_last: (N, 2).
    """
    N = scal_pre.shape[0]

    # TODO(synk): in a full port the last EqBlock / node embedding would emit
    # this bf16 [scal|rot_m0|rot_m1] slab directly; here the one small concat
    # (128 B/node bf16) replaces the previous 512 B/node f32 packing pass.
    feat = jnp.concatenate(
        [scal_pre.astype(jnp.bfloat16),
         rot_pre[:, :, 0].astype(jnp.bfloat16),
         rot_pre[:, :, 1].astype(jnp.bfloat16)], axis=1)             # (N, 64)

    R = rot_theta[:, 0].reshape(N, 4).astype(jnp.float32)            # R00 R01 R10 R11
    aux = jnp.concatenate(
        [R, u_last[:, None].astype(jnp.float32), v_last.astype(jnp.float32),
         jnp.zeros((N, 1), jnp.float32)], axis=1)                    # (N, 8) f32

    tn = tile_n if tile_n is not None else _choose_tile_n(N)
    n_pad = -(-N // tn) * tn
    if n_pad != N:
        # padded zero rows are benign: LN / RMS eps keeps them finite and they
        # are sliced off below (keep the slice if this handling changes!)
        feat = jnp.pad(feat, ((0, n_pad - N), (0, 0)))
        aux = jnp.pad(aux, ((0, n_pad - N), (0, 0)))

    out = pl.pallas_call(
        _fused_heads_kernel,
        out_shape=jax.ShapeDtypeStruct((n_pad, OUT_W), jnp.float32),
        grid_spec=pltpu.PrefetchScalarGridSpec(
            num_scalar_prefetch=0,
            grid=(n_pad // tn,),
            in_specs=[
                pl.BlockSpec((tn, FEAT_DIM), lambda i: (i, 0)),       # bf16 features
                pl.BlockSpec((tn, AUX_W), lambda i: (i, 0)),          # f32 R/residuals
                pl.BlockSpec((FEAT_DIM, 2 * HID), lambda i: (0, 0)),  # W1A (bf16)
                pl.BlockSpec((FEAT_DIM, 2 * HID), lambda i: (0, 0)),  # W1B (bf16)
                pl.BlockSpec((1, 2 * HID), lambda i: (0, 0)),         # b1
                pl.BlockSpec((2 * HID, OUT_W), lambda i: (0, 0)),     # W2 (bf16)
                pl.BlockSpec((1, OUT_W), lambda i: (0, 0)),           # b2
            ],
            out_specs=pl.BlockSpec((tn, OUT_W), lambda i: (i, 0)),    # dense [u|v|0..]
        ),
        compiler_params=pltpu.CompilerParams(
            dimension_semantics=("parallel",),
            # comfortable on v5e/v6e (128 MiB) and v7x (64 MiB)
            vmem_limit_bytes=32 * 1024 * 1024,
        ),
    )(feat, aux, packed["W1A"], packed["W1B"], packed["b1"], packed["W2"],
      packed["b2"])

    out = out[:N]
    return out[:, 0], out[:, 1:3]


# ---------------------------------------------------------------------------
# Pure-JAX f32 reference of the fused stage (unpacked parameters)
# ---------------------------------------------------------------------------
def so2_layer_norm(x, params, eps=LN_EPS):
    # TODO(synk): SO2LayerNorm source unavailable; LN over scalar channels +
    # rep-norm RMS normalization with learned gains for the rot features.
    s = x["scalar"]
    mu = s.mean(axis=1, keepdims=True)
    var = s.var(axis=1, keepdims=True)
    s = (s - mu) / jnp.sqrt(var + eps) * params["ln_g"] + params["ln_b"]
    r = x["rot"]
    norms = jnp.linalg.norm(r, axis=-1)                   # (N, num_rep)
    rms = jnp.sqrt((norms ** 2).mean(axis=1, keepdims=True) + eps)
    r = r / rms[..., None] * params["ln_rg"][None, :, None]
    return {"scalar": s, "rot": r}


def so2_heads_ref(scal_pre, rot_pre, rot_theta, u_last, v_last, params):
    x = so2_layer_norm({"scalar": scal_pre, "rot": rot_pre}, params)
    scal, rot_feat = x["scalar"], x["rot"]
    N = scal.shape[0]
    R = rot_theta[:, 0]                                   # (N, 2, 2)
    Rinv = jnp.swapaxes(rot_theta, 2, 3)                  # (N, L, 2, 2)
    xr = rot_feat.reshape(N, NUM_REP, L_MAX, 2)
    rotated = jnp.einsum("njkm,nkml->njkl", xr, Rinv)     # (N, num_rep, L, 2)
    feat = jnp.concatenate(
        [scal, rotated[:, :, 0, 0], rotated[:, :, 0, 1]], axis=1)

    hU = leaky_relu(feat @ params["W1u"] + params["b1u"])
    u_out = (hU @ params["W2u"] + params["b2u"])[:, 0]    # (N,)

    hV = leaky_relu(feat @ params["W1v"] + params["b1v"])
    v_pre = hV @ params["W2v"] + params["b2v"]            # (N, 2)
    v_out = jnp.einsum("nm,nml->nl", v_pre, R)
    return u_last + u_out, v_out + v_last


# ---------------------------------------------------------------------------
# Plain-JAX glue (parts of the model whose source is not in the prompt)
# ---------------------------------------------------------------------------
def get_rot(pos, L_max):
    # TODO(synk): get_rot source unavailable; standard SO(2) irrep rotation
    # matrices at frequencies k = 1..L_max from the angle of each 2D vector.
    theta = jnp.arctan2(pos[:, 1], pos[:, 0])
    ks = jnp.arange(1, L_max + 1, dtype=jnp.float32)
    ang = theta[:, None] * ks[None, :]                    # (N, L_max)
    c, s = jnp.cos(ang), jnp.sin(ang)
    return jnp.stack([jnp.stack([c, -s], axis=-1),
                      jnp.stack([s, c], axis=-1)], axis=-2)  # (N, L_max, 2, 2)


def besel_linspace(d, start, end, number, cutoff=False):
    # TODO(synk): besel_linspace source unavailable; DimeNet-style radial Bessel basis.
    c = end - start
    n = jnp.arange(1, number + 1, dtype=jnp.float32)
    d_ = jnp.clip(d - start, 1e-6, None)[:, None]
    return jnp.sqrt(2.0 / c) * jnp.sin(n * jnp.pi * d_ / c) / d_


def node_embedding_vel(u, v, boundary_norm, y_force, is_boundary, rot_theta, params):
    # TODO(synk): Node_embedding_vel source unavailable; deterministic linear
    # stand-in producing {'scalar': (N, n_scalars), 'rot': (N, num_rep, 2)}.
    vmag = jnp.linalg.norm(v, axis=-1)                    # (N, T)
    inv = jnp.concatenate([u, vmag, is_boundary[:, None], y_force], axis=1)
    scal = leaky_relu(inv @ params["We_s"] + params["be_s"])
    vec_in = jnp.concatenate([v, boundary_norm[:, None, :]], axis=1)   # (N, T+1, 2)
    rot = jnp.einsum("ntm,jt->njm", vec_in, params["We_r"])            # (N, num_rep, 2)
    return {"scalar": scal, "rot": rot}


def rot_navier_forward(params, u, v, boundary_norm, is_boundary, y_force,
                       pos, edge_index, heads_fn):
    # "with torch.no_grad()" block (batch is None path)
    pos = pos - pos.mean(axis=0)
    rot_theta = get_rot(pos, L_MAX)                       # (N, L_max, 2, 2)
    row, col = edge_index[0], edge_index[1]
    edge_vec = pos[row] - pos[col]
    _rot = get_rot(edge_vec, L_MAX)                       # edge rotations
    distance = jnp.linalg.norm(edge_vec, axis=1)
    _dist_embedding = besel_linspace(distance, 0.0, 1.0, R_DIM, cutoff=False)

    x = node_embedding_vel(u, v, boundary_norm, y_force, is_boundary, rot_theta, params)

    for _ in range(NUM_LAYERS):
        # TODO(synk): EqBlockSimple2 source unavailable; identity passthrough
        # (edge_index / _dist_embedding / _rot are computed but unused here).
        pass

    # layer norm + SO(2) output heads + residuals (fused in the Pallas path)
    return heads_fn(x["scalar"], x["rot"], rot_theta, u[:, -1], v[:, -1, :])


def init_params(key):
    ks = jax.random.split(key, 10)
    s = 0.1
    p = {
        "We_s": s * jax.random.normal(ks[0], (2 * TIME_SLIZE + 2, N_SCALARS)),
        "be_s": jnp.zeros((N_SCALARS,)),
        "We_r": s * jax.random.normal(ks[1], (NUM_REP, TIME_SLIZE + 1)),
        "ln_g": jnp.ones((N_SCALARS,)),
        "ln_b": jnp.zeros((N_SCALARS,)),
        "ln_rg": jnp.ones((NUM_REP,)),
        "W1u": s * jax.random.normal(ks[2], (FEAT_DIM, HID)),
        "b1u": s * jax.random.normal(ks[3], (HID,)),
        "W2u": s * jax.random.normal(ks[4], (HID, 1)),
        "b2u": s * jax.random.normal(ks[5], (1,)),
        "W1v": s * jax.random.normal(ks[6], (FEAT_DIM, HID)),
        "b1v": s * jax.random.normal(ks[7], (HID,)),
        "W2v": s * jax.random.normal(ks[8], (HID, 2)),
        "b2v": s * jax.random.normal(ks[9], (2,)),
    }
    return {k: v.astype(jnp.float32) for k, v in p.items()}


if __name__ == "__main__":
    key = jax.random.PRNGKey(0)
    N, E, T = 128, 256, TIME_SLIZE
    keys = jax.random.split(key, 8)

    u = jax.random.normal(keys[0], (N, T), jnp.float32)
    v = jax.random.normal(keys[1], (N, T, 2), jnp.float32)
    boundary_norm = jax.random.normal(keys[2], (N, 2), jnp.float32)
    is_boundary = (jax.random.uniform(keys[3], (N,)) > 0.8).astype(jnp.float32)
    y_force = jax.random.normal(keys[4], (N, 1), jnp.float32)
    pos = jax.random.normal(keys[5], (N, 2), jnp.float32)
    edge_index = jax.random.randint(keys[6], (2, E), 0, N)

    params = init_params(keys[7])
    packed = pack_head_params(params)     # one-time weight packing (hoisted)

    heads_pallas = functools.partial(so2_heads_fused, packed=packed)
    heads_ref = functools.partial(so2_heads_ref, params=params)

    fwd_pallas = jax.jit(functools.partial(rot_navier_forward, heads_fn=heads_pallas))
    fwd_ref = jax.jit(functools.partial(rot_navier_forward, heads_fn=heads_ref))

    u_p, v_p = fwd_pallas(params, u, v, boundary_norm, is_boundary, y_force, pos, edge_index)
    jax.block_until_ready((u_p, v_p))

    u_r, v_r = fwd_ref(params, u, v, boundary_norm, is_boundary, y_force, pos, edge_index)
    jax.block_until_ready((u_r, v_r))

    assert u_p.shape == (N,) and v_p.shape == (N, 2)
    # kernel uses a bf16 feature slab + bf16 MXU operands (f32 accumulation,
    # f32 residuals/rotation); the reference is pure f32 -> loose tolerance.
    assert jnp.allclose(u_p, u_r, atol=4e-2, rtol=4e-2), float(jnp.max(jnp.abs(u_p - u_r)))
    assert jnp.allclose(v_p, v_r, atol=4e-2, rtol=4e-2), float(jnp.max(jnp.abs(v_p - v_r)))

    print("KERNEL_OK")
</pallas_src>

<mosaic_0001>
module attributes {stable_mosaic.version = 11 : i64} {
  func.func @_fused_heads_kernel(%arg0: i32, %arg1: memref<128x64xbf16, #tpu.memory_space<vmem>>, %arg2: memref<128x8xf32, #tpu.memory_space<vmem>>, %arg3: memref<64x384xbf16, #tpu.memory_space<vmem>>, %arg4: memref<64x384xbf16, #tpu.memory_space<vmem>>, %arg5: memref<1x384xf32, #tpu.memory_space<vmem>>, %arg6: memref<384x128xbf16, #tpu.memory_space<vmem>>, %arg7: memref<1x128xf32, #tpu.memory_space<vmem>>, %arg8: memref<128x128xf32, #tpu.memory_space<vmem>>) attributes {dimension_semantics = [#tpu.dimension_semantics<parallel>], iteration_bounds = array<i64: 1>, scalar_prefetch = 0 : i64, scratch_operands = 0 : i64, tpu.core_type = #tpu.core_type<tc>, window_params = [{transform_indices = @transform_0, window_bounds = array<i64: 128, 64>}, {transform_indices = @transform_1, window_bounds = array<i64: 128, 8>}, {pipeline_mode = #tpu.pipeline_mode<synchronous>, transform_indices = @transform_2, window_bounds = array<i64: 64, 384>}, {pipeline_mode = #tpu.pipeline_mode<synchronous>, transform_indices = @transform_3, window_bounds = array<i64: 64, 384>}, {pipeline_mode = #tpu.pipeline_mode<synchronous>, transform_indices = @transform_4, window_bounds = array<i64: 1, 384>}, {pipeline_mode = #tpu.pipeline_mode<synchronous>, transform_indices = @transform_5, window_bounds = array<i64: 384, 128>}, {pipeline_mode = #tpu.pipeline_mode<synchronous>, transform_indices = @transform_6, window_bounds = array<i64: 1, 128>}, {transform_indices = @transform_7, window_bounds = array<i64: 128, 128>}]} {
    %c0 = arith.constant 0 : index
    %c0_0 = arith.constant 0 : index
    %0 = vector.load %arg1[%c0, %c0_0] : memref<128x64xbf16, #tpu.memory_space<vmem>>, vector<128x64xbf16>
    %1 = arith.extf %0 : vector<128x64xbf16> to vector<128x64xf32>
    %c0_1 = arith.constant 0 : index
    %c0_2 = arith.constant 0 : index
    %2 = vector.load %arg2[%c0_1, %c0_2] : memref<128x8xf32, #tpu.memory_space<vmem>>, vector<128x8xf32>
    %3 = vector.extract_strided_slice %2 {offsets = [0, 0], sizes = [128, 1], strides = [1, 1]} : vector<128x8xf32> to vector<128x1xf32>
    %4 = vector.extract_strided_slice %2 {offsets = [0, 1], sizes = [128, 1], strides = [1, 1]} : vector<128x8xf32> to vector<128x1xf32>
    %5 = vector.extract_strided_slice %2 {offsets = [0, 2], sizes = [128, 1], strides = [1, 1]} : vector<128x8xf32> to vector<128x1xf32>
    %6 = vector.extract_strided_slice %2 {offsets = [0, 3], sizes = [128, 1], strides = [1, 1]} : vector<128x8xf32> to vector<128x1xf32>
    %7 = vector.extract_strided_slice %2 {offsets = [0, 4], sizes = [128, 1], strides = [1, 1]} : vector<128x8xf32> to vector<128x1xf32>
    %8 = vector.extract_strided_slice %2 {offsets = [0, 5], sizes = [128, 1], strides = [1, 1]} : vector<128x8xf32> to vector<128x1xf32>
    %9 = vector.extract_strided_slice %2 {offsets = [0, 6], sizes = [128, 1], strides = [1, 1]} : vector<128x8xf32> to vector<128x1xf32>
    %10 = tpu.iota {dimensions = array<i32: 1>} : vector<1x64xi32>
    %c32_i32 = arith.constant 32 : i32
    %11 = vector.broadcast %c32_i32 : i32 to vector<1x64xi32>
    %12 = arith.cmpi slt, %10, %11 : vector<1x64xi32>
    %c32_i32_3 = arith.constant 32 : i32
    %13 = vector.broadcast %c32_i32_3 : i32 to vector<1x64xi32>
    %14 = arith.cmpi sge, %10, %13 : vector<1x64xi32>
    %c48_i32 = arith.constant 48 : i32
    %15 = vector.broadcast %c48_i32 : i32 to vector<1x64xi32>
    %16 = arith.cmpi slt, %10, %15 : vector<1x64xi32>
    %17 = arith.andi %14, %16 : vector<1x64xi1>
    %18 = arith.extui %12 : vector<1x64xi1> to vector<1x64xi32>
    %19 = arith.sitofp %18 : vector<1x64xi32> to vector<1x64xf32>
    %cst = arith.constant 1.000000e+00 : f32
    %20 = vector.broadcast %cst : f32 to vector<1x64xf32>
    %21 = arith.subf %20, %19 : vector<1x64xf32>
    %22 = vector.broadcast %19 : vector<1x64xf32> to vector<128x64xf32>
    %23 = arith.mulf %1, %22 : vector<128x64xf32>
    %cst_4 = arith.constant dense<0.000000e+00> : vector<128xf32>
    %24 = vector.multi_reduction <add>, %23, %cst_4 [1] : vector<128x64xf32> to vector<128xf32>
    %25 = vector.shape_cast %24 : vector<128xf32> to vector<128x1xf32>
    %cst_5 = arith.constant 3.125000e-02 : f32
    %26 = vector.broadcast %cst_5 : f32 to vector<128x1xf32>
    %27 = arith.mulf %25, %26 : vector<128x1xf32>
    %28 = vector.broadcast %27 : vector<128x1xf32> to vector<128x64xf32>
    %29 = arith.subf %1, %28 : vector<128x64xf32>
    %30 = arith.mulf %29, %29 : vector<128x64xf32>
    %31 = vector.broadcast %19 : vector<1x64xf32> to vector<128x64xf32>
    %32 = arith.mulf %30, %31 : vector<128x64xf32>
    %cst_6 = arith.constant dense<0.000000e+00> : vector<128xf32>
    %33 = vector.multi_reduction <add>, %32, %cst_6 [1] : vector<128x64xf32> to vector<128xf32>
    %34 = vector.shape_cast %33 : vector<128xf32> to vector<128x1xf32>
    %cst_7 = arith.constant 3.125000e-02 : f32
    %35 = vector.broadcast %cst_7 : f32 to vector<128x1xf32>
    %36 = arith.mulf %34, %35 : vector<128x1xf32>
    %cst_8 = arith.constant 9.99999974E-6 : f32
    %37 = vector.broadcast %cst_8 : f32 to vector<128x1xf32>
    %38 = arith.addf %36, %37 : vector<128x1xf32>
    %39 = math.rsqrt %38 : vector<128x1xf32>
    %40 = arith.mulf %1, %1 : vector<128x64xf32>
    %41 = vector.broadcast %21 : vector<1x64xf32> to vector<128x64xf32>
    %42 = arith.mulf %40, %41 : vector<128x64xf32>
    %cst_9 = arith.constant dense<0.000000e+00> : vector<128xf32>
    %43 = vector.multi_reduction <add>, %42, %cst_9 [1] : vector<128x64xf32> to vector<128xf32>
    %44 = vector.shape_cast %43 : vector<128xf32> to vector<128x1xf32>
    %cst_10 = arith.constant 6.250000e-02 : f32
    %45 = vector.broadcast %cst_10 : f32 to vector<128x1xf32>
    %46 = arith.mulf %44, %45 : vector<128x1xf32>
    %cst_11 = arith.constant 9.99999974E-6 : f32
    %47 = vector.broadcast %cst_11 : f32 to vector<128x1xf32>
    %48 = arith.addf %46, %47 : vector<128x1xf32>
    %49 = math.rsqrt %48 : vector<128x1xf32>
    %50 = vector.broadcast %39 : vector<128x1xf32> to vector<128x64xf32>
    %51 = arith.mulf %29, %50 : vector<128x64xf32>
    %52 = vector.broadcast %49 : vector<128x1xf32> to vector<128x64xf32>
    %53 = arith.mulf %1, %52 : vector<128x64xf32>
    %54 = vector.shape_cast %12 : vector<1x64xi1> to vector<1x64xi1>
    %55 = vector.broadcast %54 : vector<1x64xi1> to vector<128x64xi1>
    %56 = arith.select %55, %51, %53 : vector<128x64xi1>, vector<128x64xf32>
    %57 = vector.shape_cast %17 : vector<1x64xi1> to vector<1x64xi1>
    %58 = vector.broadcast %57 : vector<1x64xi1> to vector<128x64xi1>
    %59 = vector.shape_cast %3 : vector<128x1xf32> to vector<128x1xf32>
    %60 = vector.broadcast %59 : vector<128x1xf32> to vector<128x64xf32>
    %61 = vector.shape_cast %4 : vector<128x1xf32> to vector<128x1xf32>
    %62 = vector.broadcast %61 : vector<128x1xf32> to vector<128x64xf32>
    %63 = arith.select %58, %60, %62 : vector<128x64xi1>, vector<128x64xf32>
    %cst_12 = arith.constant 1.000000e+00 : f32
    %64 = vector.shape_cast %12 : vector<1x64xi1> to vector<1x64xi1>
    %65 = vector.broadcast %64 : vector<1x64xi1> to vector<128x64xi1>
    %66 = vector.broadcast %cst_12 : f32 to vector<128x64xf32>
    %67 = arith.select %65, %66, %63 : vector<128x64xi1>, vector<128x64xf32>
    %68 = vector.shape_cast %17 : vector<1x64xi1> to vector<1x64xi1>
    %69 = vector.broadcast %68 : vector<1x64xi1> to vector<128x64xi1>
    %70 = vector.shape_cast %5 : vector<128x1xf32> to vector<128x1xf32>
    %71 = vector.broadcast %70 : vector<128x1xf32> to vector<128x64xf32>
    %72 = vector.shape_cast %6 : vector<128x1xf32> to vector<128x1xf32>
    %73 = vector.broadcast %72 : vector<128x1xf32> to vector<128x64xf32>
    %74 = arith.select %69, %71, %73 : vector<128x64xi1>, vector<128x64xf32>
    %cst_13 = arith.constant 0.000000e+00 : f32
    %75 = vector.shape_cast %12 : vector<1x64xi1> to vector<1x64xi1>
    %76 = vector.broadcast %75 : vector<1x64xi1> to vector<128x64xi1>
    %77 = vector.broadcast %cst_13 : f32 to vector<128x64xf32>
    %78 = arith.select %76, %77, %74 : vector<128x64xi1>, vector<128x64xf32>
    %79 = arith.mulf %56, %67 : vector<128x64xf32>
    %80 = arith.truncf %79 : vector<128x64xf32> to vector<128x64xbf16>
    %81 = arith.mulf %56, %78 : vector<128x64xf32>
    %82 = arith.truncf %81 : vector<128x64xf32> to vector<128x64xbf16>
    %c0_14 = arith.constant 0 : index
    %c0_15 = arith.constant 0 : index
    %83 = vector.load %arg3[%c0_14, %c0_15] : memref<64x384xbf16, #tpu.memory_space<vmem>>, vector<64x384xbf16>
    %cst_16 = arith.constant dense<0.000000e+00> : vector<128x384xf32>
    %84 = tpu.matmul %80, %83, %cst_16 {dimension_numbers = #tpu.dot_dimension_numbers<[1], [0], [0], [1], [0, 0, 1, 1], [], []>} : vector<128x64xbf16>, vector<64x384xbf16>, vector<128x384xf32> -> vector<128x384xf32>
    %c0_17 = arith.constant 0 : index
    %c0_18 = arith.constant 0 : index
    %85 = vector.load %arg4[%c0_17, %c0_18] : memref<64x384xbf16, #tpu.memory_space<vmem>>, vector<64x384xbf16>
    %cst_19 = arith.constant dense<0.000000e+00> : vector<128x384xf32>
    %86 = tpu.matmul %82, %85, %cst_19 {dimension_numbers = #tpu.dot_dimension_numbers<[1], [0], [0], [1], [0, 0, 1, 1], [], []>} : vector<128x64xbf16>, vector<64x384xbf16>, vector<128x384xf32> -> vector<128x384xf32>
    %87 = arith.addf %84, %86 : vector<128x384xf32>
    %c0_20 = arith.constant 0 : index
    %c0_21 = arith.constant 0 : index
    %88 = vector.load %arg5[%c0_20, %c0_21] : memref<1x384xf32, #tpu.memory_space<vmem>>, vector<1x384xf32>
    %89 = vector.broadcast %88 : vector<1x384xf32> to vector<128x384xf32>
    %90 = arith.addf %87, %89 : vector<128x384xf32>
    %cst_22 = arith.constant 0.000000e+00 : f32
    %91 = vector.broadcast %cst_22 : f32 to vector<128x384xf32>
    %92 = arith.cmpf ogt, %90, %91 : vector<128x384xf32>
    %cst_23 = arith.constant 0.00999999977 : f32
    %93 = vector.broadcast %cst_23 : f32 to vector<128x384xf32>
    %94 = arith.mulf %93, %90 : vector<128x384xf32>
    %95 = arith.select %92, %90, %94 : vector<128x384xi1>, vector<128x384xf32>
    %96 = arith.truncf %95 : vector<128x384xf32> to vector<128x384xbf16>
    %c0_24 = arith.constant 0 : index
    %c0_25 = arith.constant 0 : index
    %97 = vector.load %arg6[%c0_24, %c0_25] : memref<384x128xbf16, #tpu.memory_space<vmem>>, vector<384x128xbf16>
    %cst_26 = arith.constant dense<0.000000e+00> : vector<128x128xf32>
    %98 = tpu.matmul %96, %97, %cst_26 {dimension_numbers = #tpu.dot_dimension_numbers<[1], [0], [0], [1], [0, 0, 1, 1], [], []>} : vector<128x384xbf16>, vector<384x128xbf16>, vector<128x128xf32> -> vector<128x128xf32>
    %c0_27 = arith.constant 0 : index
    %c0_28 = arith.constant 0 : index
    %99 = vector.load %arg7[%c0_27, %c0_28] : memref<1x128xf32, #tpu.memory_space<vmem>>, vector<1x128xf32>
    %100 = vector.broadcast %99 : vector<1x128xf32> to vector<128x128xf32>
    %101 = arith.addf %98, %100 : vector<128x128xf32>
    %102 = vector.extract_strided_slice %101 {offsets = [0, 0], sizes = [128, 1], strides = [1, 1]} : vector<128x128xf32> to vector<128x1xf32>
    %103 = arith.addf %102, %7 : vector<128x1xf32>
    %104 = vector.extract_strided_slice %101 {offsets = [0, 1], sizes = [128, 1], strides = [1, 1]} : vector<128x128xf32> to vector<128x1xf32>
    %105 = vector.extract_strided_slice %101 {offsets = [0, 2], sizes = [128, 1], strides = [1, 1]} : vector<128x128xf32> to vector<128x1xf32>
    %106 = arith.mulf %104, %3 : vector<128x1xf32>
    %107 = arith.mulf %105, %5 : vector<128x1xf32>
    %108 = arith.addf %106, %107 : vector<128x1xf32>
    %109 = arith.addf %108, %8 : vector<128x1xf32>
    %110 = arith.mulf %104, %4 : vector<128x1xf32>
    %111 = arith.mulf %105, %6 : vector<128x1xf32>
    %112 = arith.addf %110, %111 : vector<128x1xf32>
    %113 = arith.addf %112, %9 : vector<128x1xf32>
    %114 = tpu.iota {dimensions = array<i32: 1>} : vector<1x128xi32>
    %c0_i32 = arith.constant 0 : i32
    %115 = vector.broadcast %c0_i32 : i32 to vector<1x128xi32>
    %116 = arith.cmpi eq, %114, %115 : vector<1x128xi32>
    %c1_i32 = arith.constant 1 : i32
    %117 = vector.broadcast %c1_i32 : i32 to vector<1x128xi32>
    %118 = arith.cmpi eq, %114, %117 : vector<1x128xi32>
    %c2_i32 = arith.constant 2 : i32
    %119 = vector.broadcast %c2_i32 : i32 to vector<1x128xi32>
    %120 = arith.cmpi eq, %114, %119 : vector<1x128xi32>
    %cst_29 = arith.constant 0.000000e+00 : f32
    %121 = vector.shape_cast %120 : vector<1x128xi1> to vector<1x128xi1>
    %122 = vector.broadcast %121 : vector<1x128xi1> to vector<128x128xi1>
    %123 = vector.shape_cast %113 : vector<128x1xf32> to vector<128x1xf32>
    %124 = vector.broadcast %123 : vector<128x1xf32> to vector<128x128xf32>
    %125 = vector.broadcast %cst_29 : f32 to vector<128x128xf32>
    %126 = arith.select %122, %124, %125 : vector<128x128xi1>, vector<128x128xf32>
    %127 = vector.shape_cast %118 : vector<1x128xi1> to vector<1x128xi1>
    %128 = vector.broadcast %127 : vector<1x128xi1> to vector<128x128xi1>
    %129 = vector.shape_cast %109 : vector<128x1xf32> to vector<128x1xf32>
    %130 = vector.broadcast %129 : vector<128x1xf32> to vector<128x128xf32>
    %131 = arith.select %128, %130, %126 : vector<128x128xi1>, vector<128x128xf32>
    %132 = vector.shape_cast %116 : vector<1x128xi1> to vector<1x128xi1>
    %133 = vector.broadcast %132 : vector<1x128xi1> to vector<128x128xi1>
    %134 = vector.shape_cast %103 : vector<128x1xf32> to vector<128x1xf32>
    %135 = vector.broadcast %134 : vector<128x1xf32> to vector<128x128xf32>
    %136 = arith.select %133, %135, %131 : vector<128x128xi1>, vector<128x128xf32>
    %c0_30 = arith.constant 0 : index
    %c0_31 = arith.constant 0 : index
    %137 = vector.load %arg8[%c0_30, %c0_31] : memref<128x128xf32, #tpu.memory_space<vmem>>, vector<128x128xf32>
    tpu.vector_store %arg8[%c0_30, %c0_31], %136 {strides = array<i32>} : memref<128x128xf32, #tpu.memory_space<vmem>>, vector<128x128xf32>,
    return
  }
  func.func @transform_0(%arg0: i32) -> (i32, i32) {
    %c0_i32 = arith.constant 0 : i32
    %c0_i32_0 = arith.constant 0 : i32
    return %arg0, %c0_i32 : i32, i32
  }
  func.func @transform_1(%arg0: i32) -> (i32, i32) {
    %c0_i32 = arith.constant 0 : i32
    %c0_i32_0 = arith.constant 0 : i32
    return %arg0, %c0_i32 : i32, i32
  }
  func.func @transform_2(%arg0: i32) -> (i32, i32) {
    %c0_i32 = arith.constant 0 : i32
    %c0_i32_0 = arith.constant 0 : i32
    %c0_i32_1 = arith.constant 0 : i32
    return %c0_i32, %c0_i32_0 : i32, i32
  }
  func.func @transform_3(%arg0: i32) -> (i32, i32) {
    %c0_i32 = arith.constant 0 : i32
    %c0_i32_0 = arith.constant 0 : i32
    %c0_i32_1 = arith.constant 0 : i32
    return %c0_i32, %c0_i32_0 : i32, i32
  }
  func.func @transform_4(%arg0: i32) -> (i32, i32) {
    %c0_i32 = arith.constant 0 : i32
    %c0_i32_0 = arith.constant 0 : i32
    %c0_i32_1 = arith.constant 0 : i32
    return %c0_i32, %c0_i32_0 : i32, i32
  }
  func.func @transform_5(%arg0: i32) -> (i32, i32) {
    %c0_i32 = arith.constant 0 : i32
    %c0_i32_0 = arith.constant 0 : i32
    %c0_i32_1 = arith.constant 0 : i32
    return %c0_i32, %c0_i32_0 : i32, i32
  }
  func.func @transform_6(%arg0: i32) -> (i32, i32) {
    %c0_i32 = arith.constant 0 : i32
    %c0_i32_0 = arith.constant 0 : i32
    %c0_i32_1 = arith.constant 0 : i32
    return %c0_i32, %c0_i32_0 : i32, i32
  }
  func.func @transform_7(%arg0: i32) -> (i32, i32) {
    %c0_i32 = arith.constant 0 : i32
    %c0_i32_0 = arith.constant 0 : i32
    return %arg0, %c0_i32 : i32, i32
  }
}

</mosaic_0001>

<llo_original>
// kernel: rot_navier_forward.1
$region0: #{rot_navier_forward.1}
  #allocation0 [shape = 'u32[]', space=smem, size = 0x4, offset = 0x4, fixed_abs, tag = 'smem constant byte address 0x4 - core index']
  #allocation1 [shape = 'u32[144,128]{1,0:T(1,128)}', space=vmem, size = 0x12000, scoped, tag = 'internal scratch']
  %s0 = inlined_call_operand.vmem [shape: bf16[128,64], index: 0, kind: input, shape index: {}]
  %s1 = inlined_call_operand.vmem [shape: f32[128,8], index: 1, kind: input, shape index: {}]
  %s2 = inlined_call_operand.vmem [shape: bf16[64,384], index: 2, kind: input, shape index: {}]
  %s3 = inlined_call_operand.vmem [shape: bf16[64,384], index: 3, kind: input, shape index: {}]
  %s4 = inlined_call_operand.vmem [shape: f32[1,384], index: 4, kind: input, shape index: {}]
  %s5 = inlined_call_operand.vmem [shape: bf16[384,128], index: 5, kind: input, shape index: {}]
  %s6 = inlined_call_operand.vmem [shape: f32[1,128], index: 6, kind: input, shape index: {}]
  %s7 = inlined_call_operand.vmem [shape: f32[128,128], index: 7, kind: output, shape index: {}]
  %s8 = sld [smem:[#allocation0]]
  $region38: #{rot_navier_forward.1} parent=0
    _
  %s10 = ssub.s32 1, %s8
  %s11 = scalar_select 0, %s10, %s8
  // Predicated region
  $region2: #{rot_navier_forward.1} parent=0 // pred_check
    _
  $region3: #{rot_navier_forward.1} parent=0 // pred_check_branch
    %13 = sbr.rel (0) target = $region5
  $region4: #{rot_navier_forward.1} parent=0 // pred_region
    _
  $region5: #{rot_navier_forward.1} parent=0 // pred_fallthru
    _
  // Predicated region
  $region6: #{rot_navier_forward.1} parent=0 // pred_check
    _
  $region7: #{rot_navier_forward.1} parent=0 // pred_check_branch
    %15 = sbr.rel (0) target = $region9
  $region8: #{rot_navier_forward.1} parent=0 // pred_region
    _
  $region9: #{rot_navier_forward.1} parent=0 // pred_fallthru
    _
  // Predicated region
  $region10: #{rot_navier_forward.1} parent=0 // pred_check
    _
  $region11: #{rot_navier_forward.1} parent=0 // pred_check_branch
    %17 = sbr.rel (0) target = $region13
  $region12: #{rot_navier_forward.1} parent=0 // pred_region
    _
  $region13: #{rot_navier_forward.1} parent=0 // pred_fallthru
    _
  // Predicated region
  $region14: #{rot_navier_forward.1} parent=0 // pred_check
    _
  $region15: #{rot_navier_forward.1} parent=0 // pred_check_branch
    %19 = sbr.rel (0) target = $region17
  $region16: #{rot_navier_forward.1} parent=0 // pred_region
    _
  $region17: #{rot_navier_forward.1} parent=0 // pred_fallthru
    _
  // Predicated region
  $region18: #{rot_navier_forward.1} parent=0 // pred_check
    _
  $region19: #{rot_navier_forward.1} parent=0 // pred_check_branch
    %21 = sbr.rel (0) target = $region21
  $region20: #{rot_navier_forward.1} parent=0 // pred_region
    _
  $region21: #{rot_navier_forward.1} parent=0 // pred_fallthru
    _
  // Predicated region
  $region22: #{rot_navier_forward.1} parent=0 // pred_check
    _
  $region23: #{rot_navier_forward.1} parent=0 // pred_check_branch
    %23 = sbr.rel (0) target = $region25
  $region24: #{rot_navier_forward.1} parent=0 // pred_region
    _
  $region25: #{rot_navier_forward.1} parent=0 // pred_fallthru
    _
  // Predicated region
  $region26: #{rot_navier_forward.1} parent=0 // pred_check
    _
  $region27: #{rot_navier_forward.1} parent=0 // pred_check_branch
    %25 = sbr.rel (0) target = $region29
  $region28: #{rot_navier_forward.1} parent=0 // pred_region
    _
  $region29: #{rot_navier_forward.1} parent=0 // pred_fallthru
    _
  %v27 = vld [vmem:[%s0] sm:$0xf]
  %v28 = vld [vmem:[%s0 + $0x4] sm:$0xf]
  %v29 = vld [vmem:[%s0 + $0x8] sm:$0xf]
  %v30 = vld [vmem:[%s0 + $0xc] sm:$0xf]
  %v31 = vld [vmem:[%s0 + $0x10] sm:$0xf]
  %v32 = vld [vmem:[%s0 + $0x14] sm:$0xf]
  %v33 = vld [vmem:[%s0 + $0x18] sm:$0xf]
  %v34 = vld [vmem:[%s0 + $0x1c] sm:$0xf]
  %v35 = vld [vmem:[%s0 + $0x20] sm:$0xf]
  %v36 = vld [vmem:[%s0 + $0x24] sm:$0xf]
  %v37 = vld [vmem:[%s0 + $0x28] sm:$0xf]
  %v38 = vld [vmem:[%s0 + $0x2c] sm:$0xf]
  %v39 = vld [vmem:[%s0 + $0x30] sm:$0xf]
  %v40 = vld [vmem:[%s0 + $0x34] sm:$0xf]
  %v41 = vld [vmem:[%s0 + $0x38] sm:$0xf]
  %v42 = vld [vmem:[%s0 + $0x3c] sm:$0xf]
  %v43 = vunpack.c.l.bf16 %v27
  %v44 = vunpack.c.l.bf16 %v28
  %v45 = vunpack.c.l.bf16 %v29
  %v46 = vunpack.c.l.bf16 %v30
  %v47 = vunpack.c.l.bf16 %v31
  %v48 = vunpack.c.l.bf16 %v32
  %v49 = vunpack.c.l.bf16 %v33
  %v50 = vunpack.c.l.bf16 %v34
  %v51 = vunpack.c.l.bf16 %v35
  %v52 = vunpack.c.l.bf16 %v36
  %v53 = vunpack.c.l.bf16 %v37
  %v54 = vunpack.c.l.bf16 %v38
  %v55 = vunpack.c.l.bf16 %v39
  %v56 = vunpack.c.l.bf16 %v40
  %v57 = vunpack.c.l.bf16 %v41
  %v58 = vunpack.c.l.bf16 %v42
  %v59 = vld [vmem:[%s1] sm:$0xff]
  %v60 = vld [vmem:[%s1 + $0x8] sm:$0xff]
  %v61 = vld [vmem:[%s1 + $0x10] sm:$0xff]
  %v62 = vld [vmem:[%s1 + $0x18] sm:$0xff]
  %v63 = vld [vmem:[%s1 + $0x20] sm:$0xff]
  %v64 = vld [vmem:[%s1 + $0x28] sm:$0xff]
  %v65 = vld [vmem:[%s1 + $0x30] sm:$0xff]
  %v66 = vld [vmem:[%s1 + $0x38] sm:$0xff]
  %v67 = vld [vmem:[%s1 + $0x40] sm:$0xff]
  %v68 = vld [vmem:[%s1 + $0x48] sm:$0xff]
  %v69 = vld [vmem:[%s1 + $0x50] sm:$0xff]
  %v70 = vld [vmem:[%s1 + $0x58] sm:$0xff]
  %v71 = vld [vmem:[%s1 + $0x60] sm:$0xff]
  %v72 = vld [vmem:[%s1 + $0x68] sm:$0xff]
  %v73 = vld [vmem:[%s1 + $0x70] sm:$0xff]
  %v74 = vld [vmem:[%s1 + $0x78] sm:$0xff]
  %v75 = vlaneseq
  %v76 = vand.u32 %v75, 127
  %vm77 = vcmp.lt.s32.totalorder %v76, 32
  %vm78 = vcmp.ge.s32.totalorder %v76, 32
  %vm79 = vcmp.lt.s32.totalorder %v76, 48
  %vm80 = vmand %vm78, %vm79
  %v81 = vsel %vm77, 1, 0
  %v82 = vcvt.s32.f32 %v81
  %v83 = vsub.f32 1.0, %v82
  %v84 = vmul.f32 %v43, %v82
  %v85 = vmul.f32 %v44, %v82
  %v86 = vmul.f32 %v45, %v82
  %v87 = vmul.f32 %v46, %v82
  %v88 = vmul.f32 %v47, %v82
  %v89 = vmul.f32 %v48, %v82
  %v90 = vmul.f32 %v49, %v82
  %v91 = vmul.f32 %v50, %v82
  %v92 = vmul.f32 %v51, %v82
  %v93 = vmul.f32 %v52, %v82
  %v94 = vmul.f32 %v53, %v82
  %v95 = vmul.f32 %v54, %v82
  %v96 = vmul.f32 %v55, %v82
  %v97 = vmul.f32 %v56, %v82
  %v98 = vmul.f32 %v57, %v82
  %v99 = vmul.f32 %v58, %v82
  %vm100 = vcmask 523264
  %v101 = vsel %vm100, %v84, 0.0
  %102 = vadd.xlane.f32.xlu0 %v101
  %v103 = vpop.xlane.xlu0 %102
  %v104 = vsel %vm100, %v85, 0.0
  %105 = vadd.xlane.f32.xlu0 %v104
  %v106 = vpop.xlane.xlu0 %105
  %v107 = vsel %vm100, %v86, 0.0
  %108 = vadd.xlane.f32.xlu0 %v107
  %v109 = vpop.xlane.xlu0 %108
  %v110 = vsel %vm100, %v87, 0.0
  %111 = vadd.xlane.f32.xlu0 %v110
  %v112 = vpop.xlane.xlu0 %111
  %v113 = vsel %vm100, %v88, 0.0
  %114 = vadd.xlane.f32.xlu0 %v113
  %v115 = vpop.xlane.xlu0 %114
  %v116 = vsel %vm100, %v89, 0.0
  %117 = vadd.xlane.f32.xlu0 %v116
  %v118 = vpop.xlane.xlu0 %117
  %v119 = vsel %vm100, %v90, 0.0
  %120 = vadd.xlane.f32.xlu0 %v119
  %v121 = vpop.xlane.xlu0 %120
  %v122 = vsel %vm100, %v91, 0.0
  %123 = vadd.xlane.f32.xlu0 %v122
  %v124 = vpop.xlane.xlu0 %123
  %v125 = vsel %vm100, %v92, 0.0
  %126 = vadd.xlane.f32.xlu0 %v125
  %v127 = vpop.xlane.xlu0 %126
  %v128 = vsel %vm100, %v93, 0.0
  %129 = vadd.xlane.f32.xlu0 %v128
  %v130 = vpop.xlane.xlu0 %129
  %v131 = vsel %vm100, %v94, 0.0
  %132 = vadd.xlane.f32.xlu0 %v131
  %v133 = vpop.xlane.xlu0 %132
  %v134 = vsel %vm100, %v95, 0.0
  %135 = vadd.xlane.f32.xlu0 %v134
  %v136 = vpop.xlane.xlu0 %135
  %v137 = vsel %vm100, %v96, 0.0
  %138 = vadd.xlane.f32.xlu0 %v137
  %v139 = vpop.xlane.xlu0 %138
  %v140 = vsel %vm100, %v97, 0.0
  %141 = vadd.xlane.f32.xlu0 %v140
  %v142 = vpop.xlane.xlu0 %141
  %v143 = vsel %vm100, %v98, 0.0
  %144 = vadd.xlane.f32.xlu0 %v143
  %v145 = vpop.xlane.xlu0 %144
  %v146 = vsel %vm100, %v99, 0.0
  %147 = vadd.xlane.f32.xlu0 %v146
  %v148 = vpop.xlane.xlu0 %147
  %v149 = vmul.f32 %v103, 0.03125
  %v150 = vmul.f32 %v106, 0.03125
  %v151 = vmul.f32 %v109, 0.03125
  %v152 = vmul.f32 %v112, 0.03125
  %v153 = vmul.f32 %v115, 0.03125
  %v154 = vmul.f32 %v118, 0.03125
  %v155 = vmul.f32 %v121, 0.03125
  %v156 = vmul.f32 %v124, 0.03125
  %v157 = vmul.f32 %v127, 0.03125
  %v158 = vmul.f32 %v130, 0.03125
  %v159 = vmul.f32 %v133, 0.03125
  %v160 = vmul.f32 %v136, 0.03125
  %v161 = vmul.f32 %v139, 0.03125
  %v162 = vmul.f32 %v142, 0.03125
  %v163 = vmul.f32 %v145, 0.03125
  %v164 = vmul.f32 %v148, 0.03125
  %v165 = vsub.f32 %v43, %v149
  %v166 = vsub.f32 %v44, %v150
  %v167 = vsub.f32 %v45, %v151
  %v168 = vsub.f32 %v46, %v152
  %v169 = vsub.f32 %v47, %v153
  %v170 = vsub.f32 %v48, %v154
  %v171 = vsub.f32 %v49, %v155
  %v172 = vsub.f32 %v50, %v156
  %v173 = vsub.f32 %v51, %v157
  %v174 = vsub.f32 %v52, %v158
  %v175 = vsub.f32 %v53, %v159
  %v176 = vsub.f32 %v54, %v160
  %v177 = vsub.f32 %v55, %v161
  %v178 = vsub.f32 %v56, %v162
  %v179 = vsub.f32 %v57, %v163
  %v180 = vsub.f32 %v58, %v164
  %v181 = vmul.f32 %v165, %v165
  %v182 = vmul.f32 %v166, %v166
  %v183 = vmul.f32 %v167, %v167
  %v184 = vmul.f32 %v168, %v168
  %v185 = vmul.f32 %v169, %v169
  %v186 = vmul.f32 %v170, %v170
  %v187 = vmul.f32 %v171, %v171
  %v188 = vmul.f32 %v172, %v172
  %v189 = vmul.f32 %v173, %v173
  %v190 = vmul.f32 %v174, %v174
  %v191 = vmul.f32 %v175, %v175
  %v192 = vmul.f32 %v176, %v176
  %v193 = vmul.f32 %v177, %v177
  %v194 = vmul.f32 %v178, %v178
  %v195 = vmul.f32 %v179, %v179
  %v196 = vmul.f32 %v180, %v180
  %v197 = vmul.f32 %v181, %v82
  %v198 = vmul.f32 %v182, %v82
  %v199 = vmul.f32 %v183, %v82
  %v200 = vmul.f32 %v184, %v82
  %v201 = vmul.f32 %v185, %v82
  %v202 = vmul.f32 %v186, %v82
  %v203 = vmul.f32 %v187, %v82
  %v204 = vmul.f32 %v188, %v82
  %v205 = vmul.f32 %v189, %v82
  %v206 = vmul.f32 %v190, %v82
  %v207 = vmul.f32 %v191, %v82
  %v208 = vmul.f32 %v192, %v82
  %v209 = vmul.f32 %v193, %v82
  %v210 = vmul.f32 %v194, %v82
  %v211 = vmul.f32 %v195, %v82
  %v212 = vmul.f32 %v196, %v82
  %v213 = vsel %vm100, %v197, 0.0
  %214 = vadd.xlane.f32.xlu0 %v213
  %v215 = vpop.xlane.xlu0 %214
  %v216 = vsel %vm100, %v198, 0.0
  %217 = vadd.xlane.f32.xlu0 %v216
  %v218 = vpop.xlane.xlu0 %217
  %v219 = vsel %vm100, %v199, 0.0
  %220 = vadd.xlane.f32.xlu0 %v219
  %v221 = vpop.xlane.xlu0 %220
  %v222 = vsel %vm100, %v200, 0.0
  %223 = vadd.xlane.f32.xlu0 %v222
  %v224 = vpop.xlane.xlu0 %223
  %v225 = vsel %vm100, %v201, 0.0
  %226 = vadd.xlane.f32.xlu0 %v225
  %v227 = vpop.xlane.xlu0 %226
  %v228 = vsel %vm100, %v202, 0.0
  %229 = vadd.xlane.f32.xlu0 %v228
  %v230 = vpop.xlane.xlu0 %229
  %v231 = vsel %vm100, %v203, 0.0
  %232 = vadd.xlane.f32.xlu0 %v231
  %v233 = vpop.xlane.xlu0 %232
  %v234 = vsel %vm100, %v204, 0.0
  %235 = vadd.xlane.f32.xlu0 %v234
  %v236 = vpop.xlane.xlu0 %235
  %v237 = vsel %vm100, %v205, 0.0
  %238 = vadd.xlane.f32.xlu0 %v237
  %v239 = vpop.xlane.xlu0 %238
  %v240 = vsel %vm100, %v206, 0.0
  %241 = vadd.xlane.f32.xlu0 %v240
  %v242 = vpop.xlane.xlu0 %241
  %v243 = vsel %vm100, %v207, 0.0
  %244 = vadd.xlane.f32.xlu0 %v243
  %v245 = vpop.xlane.xlu0 %244
  %v246 = vsel %vm100, %v208, 0.0
  %247 = vadd.xlane.f32.xlu0 %v246
  %v248 = vpop.xlane.xlu0 %247
  %v249 = vsel %vm100, %v209, 0.0
  %250 = vadd.xlane.f32.xlu0 %v249
  %v251 = vpop.xlane.xlu0 %250
  %v252 = vsel %vm100, %v210, 0.0
  %253 = vadd.xlane.f32.xlu0 %v252
  %v254 = vpop.xlane.xlu0 %253
  %v255 = vsel %vm100, %v211, 0.0
  %256 = vadd.xlane.f32.xlu0 %v255
  %v257 = vpop.xlane.xlu0 %256
  %v258 = vsel %vm100, %v212, 0.0
  %259 = vadd.xlane.f32.xlu0 %v258
  %v260 = vpop.xlane.xlu0 %259
  %v261 = vmul.f32 %v215, 0.03125
  %v262 = vmul.f32 %v218, 0.03125
  %v263 = vmul.f32 %v221, 0.03125
  %v264 = vmul.f32 %v224, 0.03125
  %v265 = vmul.f32 %v227, 0.03125
  %v266 = vmul.f32 %v230, 0.03125
  %v267 = vmul.f32 %v233, 0.03125
  %v268 = vmul.f32 %v236, 0.03125
  %v269 = vmul.f32 %v239, 0.03125
  %v270 = vmul.f32 %v242, 0.03125
  %v271 = vmul.f32 %v245, 0.03125
  %v272 = vmul.f32 %v248, 0.03125
  %v273 = vmul.f32 %v251, 0.03125
  %v274 = vmul.f32 %v254, 0.03125
  %v275 = vmul.f32 %v257, 0.03125
  %v276 = vmul.f32 %v260, 0.03125
  %v277 = vadd.f32 %v261, 1e-05
  %v278 = vadd.f32 %v262, 1e-05
  %v279 = vadd.f32 %v263, 1e-05
  %v280 = vadd.f32 %v264, 1e-05
  %v281 = vadd.f32 %v265, 1e-05
  %v282 = vadd.f32 %v266, 1e-05
  %v283 = vadd.f32 %v267, 1e-05
  %v284 = vadd.f32 %v268, 1e-05
  %v285 = vadd.f32 %v269, 1e-05
  %v286 = vadd.f32 %v270, 1e-05
  %v287 = vadd.f32 %v271, 1e-05
  %v288 = vadd.f32 %v272, 1e-05
  %v289 = vadd.f32 %v273, 1e-05
  %v290 = vadd.f32 %v274, 1e-05
  %v291 = vadd.f32 %v275, 1e-05
  %v292 = vadd.f32 %v276, 1e-05
  %v293 = vrsqrt.pop %v277
  %v294 = vrsqrt.pop %v278
  %v295 = vrsqrt.pop %v279
  %v296 = vrsqrt.pop %v280
  %v297 = vrsqrt.pop %v281
  %v298 = vrsqrt.pop %v282
  %v299 = vrsqrt.pop %v283
  %v300 = vrsqrt.pop %v284
  %v301 = vrsqrt.pop %v285
  %v302 = vrsqrt.pop %v286
  %v303 = vrsqrt.pop %v287
  %v304 = vrsqrt.pop %v288
  %v305 = vrsqrt.pop %v289
  %v306 = vrsqrt.pop %v290
  %v307 = vrsqrt.pop %v291
  %v308 = vrsqrt.pop %v292
  %v309 = vmul.f32 %v43, %v43
  %v310 = vmul.f32 %v44, %v44
  %v311 = vmul.f32 %v45, %v45
  %v312 = vmul.f32 %v46, %v46
  %v313 = vmul.f32 %v47, %v47
  %v314 = vmul.f32 %v48, %v48
  %v315 = vmul.f32 %v49, %v49
  %v316 = vmul.f32 %v50, %v50
  %v317 = vmul.f32 %v51, %v51
  %v318 = vmul.f32 %v52, %v52
  %v319 = vmul.f32 %v53, %v53
  %v320 = vmul.f32 %v54, %v54
  %v321 = vmul.f32 %v55, %v55
  %v322 = vmul.f32 %v56, %v56
  %v323 = vmul.f32 %v57, %v57
  %v324 = vmul.f32 %v58, %v58
  %v325 = vmul.f32 %v309, %v83
  %v326 = vmul.f32 %v310, %v83
  %v327 = vmul.f32 %v311, %v83
  %v328 = vmul.f32 %v312, %v83
  %v329 = vmul.f32 %v313, %v83
  %v330 = vmul.f32 %v314, %v83
  %v331 = vmul.f32 %v315, %v83
  %v332 = vmul.f32 %v316, %v83
  %v333 = vmul.f32 %v317, %v83
  %v334 = vmul.f32 %v318, %v83
  %v335 = vmul.f32 %v319, %v83
  %v336 = vmul.f32 %v320, %v83
  %v337 = vmul.f32 %v321, %v83
  %v338 = vmul.f32 %v322, %v83
  %v339 = vmul.f32 %v323, %v83
  %v340 = vmul.f32 %v324, %v83
  %v341 = vsel %vm100, %v325, 0.0
  %342 = vadd.xlane.f32.xlu0 %v341
  %v343 = vpop.xlane.xlu0 %342
  %v344 = vsel %vm100, %v326, 0.0
  %345 = vadd.xlane.f32.xlu0 %v344
  %v346 = vpop.xlane.xlu0 %345
  %v347 = vsel %vm100, %v327, 0.0
  %348 = vadd.xlane.f32.xlu0 %v347
  %v349 = vpop.xlane.xlu0 %348
  %v350 = vsel %vm100, %v328, 0.0
  %351 = vadd.xlane.f32.xlu0 %v350
  %v352 = vpop.xlane.xlu0 %351
  %v353 = vsel %vm100, %v329, 0.0
  %354 = vadd.xlane.f32.xlu0 %v353
  %v355 = vpop.xlane.xlu0 %354
  %v356 = vsel %vm100, %v330, 0.0
  %357 = vadd.xlane.f32.xlu0 %v356
  %v358 = vpop.xlane.xlu0 %357
  %v359 = vsel %vm100, %v331, 0.0
  %360 = vadd.xlane.f32.xlu0 %v359
  %v361 = vpop.xlane.xlu0 %360
  %v362 = vsel %vm100, %v332, 0.0
  %363 = vadd.xlane.f32.xlu0 %v362
  %v364 = vpop.xlane.xlu0 %363
  %v365 = vsel %vm100, %v333, 0.0
  %366 = vadd.xlane.f32.xlu0 %v365
  %v367 = vpop.xlane.xlu0 %366
  %v368 = vsel %vm100, %v334, 0.0
  %369 = vadd.xlane.f32.xlu0 %v368
  %v370 = vpop.xlane.xlu0 %369
  %v371 = vsel %vm100, %v335, 0.0
  %372 = vadd.xlane.f32.xlu0 %v371
  %v373 = vpop.xlane.xlu0 %372
  %v374 = vsel %vm100, %v336, 0.0
  %375 = vadd.xlane.f32.xlu0 %v374
  %v376 = vpop.xlane.xlu0 %375
  %v377 = vsel %vm100, %v337, 0.0
  %378 = vadd.xlane.f32.xlu0 %v377
  %v379 = vpop.xlane.xlu0 %378
  %v380 = vsel %vm100, %v338, 0.0
  %381 = vadd.xlane.f32.xlu0 %v380
  %v382 = vpop.xlane.xlu0 %381
  %v383 = vsel %vm100, %v339, 0.0
  %384 = vadd.xlane.f32.xlu0 %v383
  %v385 = vpop.xlane.xlu0 %384
  %v386 = vsel %vm100, %v340, 0.0
  %387 = vadd.xlane.f32.xlu0 %v386
  %v388 = vpop.xlane.xlu0 %387
  %v389 = vmul.f32 %v343, 0.0625
  %v390 = vmul.f32 %v346, 0.0625
  %v391 = vmul.f32 %v349, 0.0625
  %v392 = vmul.f32 %v352, 0.0625
  %v393 = vmul.f32 %v355, 0.0625
  %v394 = vmul.f32 %v358, 0.0625
  %v395 = vmul.f32 %v361, 0.0625
  %v396 = vmul.f32 %v364, 0.0625
  %v397 = vmul.f32 %v367, 0.0625
  %v398 = vmul.f32 %v370, 0.0625
  %v399 = vmul.f32 %v373, 0.0625
  %v400 = vmul.f32 %v376, 0.0625
  %v401 = vmul.f32 %v379, 0.0625
  %v402 = vmul.f32 %v382, 0.0625
  %v403 = vmul.f32 %v385, 0.0625
  %v404 = vmul.f32 %v388, 0.0625
  %v405 = vadd.f32 %v389, 1e-05
  %v406 = vadd.f32 %v390, 1e-05
  %v407 = vadd.f32 %v391, 1e-05
  %v408 = vadd.f32 %v392, 1e-05
  %v409 = vadd.f32 %v393, 1e-05
  %v410 = vadd.f32 %v394, 1e-05
  %v411 = vadd.f32 %v395, 1e-05
  %v412 = vadd.f32 %v396, 1e-05
  %v413 = vadd.f32 %v397, 1e-05
  %v414 = vadd.f32 %v398, 1e-05
  %v415 = vadd.f32 %v399, 1e-05
  %v416 = vadd.f32 %v400, 1e-05
  %v417 = vadd.f32 %v401, 1e-05
  %v418 = vadd.f32 %v402, 1e-05
  %v419 = vadd.f32 %v403, 1e-05
  %v420 = vadd.f32 %v404, 1e-05
  %v421 = vrsqrt.pop %v405
  %v422 = vrsqrt.pop %v406
  %v423 = vrsqrt.pop %v407
  %v424 = vrsqrt.pop %v408
  %v425 = vrsqrt.pop %v409
  %v426 = vrsqrt.pop %v410
  %v427 = vrsqrt.pop %v411
  %v428 = vrsqrt.pop %v412
  %v429 = vrsqrt.pop %v413
  %v430 = vrsqrt.pop %v414
  %v431 = vrsqrt.pop %v415
  %v432 = vrsqrt.pop %v416
  %v433 = vrsqrt.pop %v417
  %v434 = vrsqrt.pop %v418
  %v435 = vrsqrt.pop %v419
  %v436 = vrsqrt.pop %v420
  %v437 = vmul.f32 %v165, %v293
  %v438 = vmul.f32 %v166, %v294
  %v439 = vmul.f32 %v167, %v295
  %v440 = vmul.f32 %v168, %v296
  %v441 = vmul.f32 %v169, %v297
  %v442 = vmul.f32 %v170, %v298
  %v443 = vmul.f32 %v171, %v299
  %v444 = vmul.f32 %v172, %v300
  %v445 = vmul.f32 %v173, %v301
  %v446 = vmul.f32 %v174, %v302
  %v447 = vmul.f32 %v175, %v303
  %v448 = vmul.f32 %v176, %v304
  %v449 = vmul.f32 %v177, %v305
  %v450 = vmul.f32 %v178, %v306
  %v451 = vmul.f32 %v179, %v307
  %v452 = vmul.f32 %v180, %v308
  %v453 = vmul.f32 %v43, %v421
  %v454 = vmul.f32 %v44, %v422
  %v455 = vmul.f32 %v45, %v423
  %v456 = vmul.f32 %v46, %v424
  %v457 = vmul.f32 %v47, %v425
  %v458 = vmul.f32 %v48, %v426
  %v459 = vmul.f32 %v49, %v427
  %v460 = vmul.f32 %v50, %v428
  %v461 = vmul.f32 %v51, %v429
  %v462 = vmul.f32 %v52, %v430
  %v463 = vmul.f32 %v53, %v431
  %v464 = vmul.f32 %v54, %v432
  %v465 = vmul.f32 %v55, %v433
  %v466 = vmul.f32 %v56, %v434
  %v467 = vmul.f32 %v57, %v435
  %v468 = vmul.f32 %v58, %v436
  %vm469 = vcmp.eq.s32.totalorder %v81, 1
  %v470 = vsel %vm469, %v437, %v453
  %v471 = vsel %vm469, %v438, %v454
  %v472 = vsel %vm469, %v439, %v455
  %v473 = vsel %vm469, %v440, %v456
  %v474 = vsel %vm469, %v441, %v457
  %v475 = vsel %vm469, %v442, %v458
  %v476 = vsel %vm469, %v443, %v459
  %v477 = vsel %vm469, %v444, %v460
  %v478 = vsel %vm469, %v445, %v461
  %v479 = vsel %vm469, %v446, %v462
  %v480 = vsel %vm469, %v447, %v463
  %v481 = vsel %vm469, %v448, %v464
  %v482 = vsel %vm469, %v449, %v465
  %v483 = vsel %vm469, %v450, %v466
  %v484 = vsel %vm469, %v451, %v467
  %v485 = vsel %vm469, %v452, %v468
  %v486 = vsel %vm80, 1, 0
  %vm487 = vcmp.eq.s32.totalorder %v486, 1
  %489 = vset.pattern.permute.xlu0 0
  %490 = vperm.xlu0 %489, %v59
  %v491 = vpop.permute.xlu0 %490
  %494 = vset.pattern.permute.xlu0 0
  %495 = vperm.xlu0 %494, %v60
  %v496 = vpop.permute.xlu0 %495
  %499 = vset.pattern.permute.xlu0 0
  %500 = vperm.xlu0 %499, %v61
  %v501 = vpop.permute.xlu0 %500
  %504 = vset.pattern.permute.xlu0 0
  %505 = vperm.xlu0 %504, %v62
  %v506 = vpop.permute.xlu0 %505
  %509 = vset.pattern.permute.xlu0 0
  %510 = vperm.xlu0 %509, %v63
  %v511 = vpop.permute.xlu0 %510
  %514 = vset.pattern.permute.xlu0 0
  %515 = vperm.xlu0 %514, %v64
  %v516 = vpop.permute.xlu0 %515
  %519 = vset.pattern.permute.xlu0 0
  %520 = vperm.xlu0 %519, %v65
  %v521 = vpop.permute.xlu0 %520
  %524 = vset.pattern.permute.xlu0 0
  %525 = vperm.xlu0 %524, %v66
  %v526 = vpop.permute.xlu0 %525
  %529 = vset.pattern.permute.xlu0 0
  %530 = vperm.xlu0 %529, %v67
  %v531 = vpop.permute.xlu0 %530
  %534 = vset.pattern.permute.xlu0 0
  %535 = vperm.xlu0 %534, %v68
  %v536 = vpop.permute.xlu0 %535
  %539 = vset.pattern.permute.xlu0 0
  %540 = vperm.xlu0 %539, %v69
  %v541 = vpop.permute.xlu0 %540
  %544 = vset.pattern.permute.xlu0 0
  %545 = vperm.xlu0 %544, %v70
  %v546 = vpop.permute.xlu0 %545
  %549 = vset.pattern.permute.xlu0 0
  %550 = vperm.xlu0 %549, %v71
  %v551 = vpop.permute.xlu0 %550
  %554 = vset.pattern.permute.xlu0 0
  %555 = vperm.xlu0 %554, %v72
  %v556 = vpop.permute.xlu0 %555
  %559 = vset.pattern.permute.xlu0 0
  %560 = vperm.xlu0 %559, %v73
  %v561 = vpop.permute.xlu0 %560
  %564 = vset.pattern.permute.xlu0 0
  %565 = vperm.xlu0 %564, %v74
  %v566 = vpop.permute.xlu0 %565
  %568 = vset.pattern.permute.xlu0 1
  %569 = vperm.xlu0 %568, %v59
  %v570 = vpop.permute.xlu0 %569
  %572 = vset.pattern.permute.xlu0 1
  %573 = vperm.xlu0 %572, %v60
  %v574 = vpop.permute.xlu0 %573
  %576 = vset.pattern.permute.xlu0 1
  %577 = vperm.xlu0 %576, %v61
  %v578 = vpop.permute.xlu0 %577
  %580 = vset.pattern.permute.xlu0 1
  %581 = vperm.xlu0 %580, %v62
  %v582 = vpop.permute.xlu0 %581
  %584 = vset.pattern.permute.xlu0 1
  %585 = vperm.xlu0 %584, %v63
  %v586 = vpop.permute.xlu0 %585
  %588 = vset.pattern.permute.xlu0 1
  %589 = vperm.xlu0 %588, %v64
  %v590 = vpop.permute.xlu0 %589
  %592 = vset.pattern.permute.xlu0 1
  %593 = vperm.xlu0 %592, %v65
  %v594 = vpop.permute.xlu0 %593
  %596 = vset.pattern.permute.xlu0 1
  %597 = vperm.xlu0 %596, %v66
  %v598 = vpop.permute.xlu0 %597
  %600 = vset.pattern.permute.xlu0 1
  %601 = vperm.xlu0 %600, %v67
  %v602 = vpop.permute.xlu0 %601
  %604 = vset.pattern.permute.xlu0 1
  %605 = vperm.xlu0 %604, %v68
  %v606 = vpop.permute.xlu0 %605
  %608 = vset.pattern.permute.xlu0 1
  %609 = vperm.xlu0 %608, %v69
  %v610 = vpop.permute.xlu0 %609
  %612 = vset.pattern.permute.xlu0 1
  %613 = vperm.xlu0 %612, %v70
  %v614 = vpop.permute.xlu0 %613
  %616 = vset.pattern.permute.xlu0 1
  %617 = vperm.xlu0 %616, %v71
  %v618 = vpop.permute.xlu0 %617
  %620 = vset.pattern.permute.xlu0 1
  %621 = vperm.xlu0 %620, %v72
  %v622 = vpop.permute.xlu0 %621
  %624 = vset.pattern.permute.xlu0 1
  %625 = vperm.xlu0 %624, %v73
  %v626 = vpop.permute.xlu0 %625
  %628 = vset.pattern.permute.xlu0 1
  %629 = vperm.xlu0 %628, %v74
  %v630 = vpop.permute.xlu0 %629
  %v632 = vsel %vm487, %v491, %v570
  %v633 = vsel %vm487, %v496, %v574
  %v634 = vsel %vm487, %v501, %v578
  %v635 = vsel %vm487, %v506, %v582
  %v636 = vsel %vm487, %v511, %v586
  %v637 = vsel %vm487, %v516, %v590
  %v638 = vsel %vm487, %v521, %v594
  %v639 = vsel %vm487, %v526, %v598
  %v640 = vsel %vm487, %v531, %v602
  %v641 = vsel %vm487, %v536, %v606
  %v642 = vsel %vm487, %v541, %v610
  %v643 = vsel %vm487, %v546, %v614
  %v644 = vsel %vm487, %v551, %v618
  %v645 = vsel %vm487, %v556, %v622
  %v646 = vsel %vm487, %v561, %v626
  %v647 = vsel %vm487, %v566, %v630
  %v648 = vsel %vm469, 1.0, %v632
  %v649 = vsel %vm469, 1.0, %v633
  %v650 = vsel %vm469, 1.0, %v634
  %v651 = vsel %vm469, 1.0, %v635
  %v652 = vsel %vm469, 1.0, %v636
  %v653 = vsel %vm469, 1.0, %v637
  %v654 = vsel %vm469, 1.0, %v638
  %v655 = vsel %vm469, 1.0, %v639
  %v656 = vsel %vm469, 1.0, %v640
  %v657 = vsel %vm469, 1.0, %v641
  %v658 = vsel %vm469, 1.0, %v642
  %v659 = vsel %vm469, 1.0, %v643
  %v660 = vsel %vm469, 1.0, %v644
  %v661 = vsel %vm469, 1.0, %v645
  %v662 = vsel %vm469, 1.0, %v646
  %v663 = vsel %vm469, 1.0, %v647
  %664 = vset.pattern.permute.xlu0 2
  %665 = vperm.xlu0 %664, %v59
  %v666 = vpop.permute.xlu0 %665
  %668 = vset.pattern.permute.xlu0 2
  %669 = vperm.xlu0 %668, %v60
  %v670 = vpop.permute.xlu0 %669
  %672 = vset.pattern.permute.xlu0 2
  %673 = vperm.xlu0 %672, %v61
  %v674 = vpop.permute.xlu0 %673
  %676 = vset.pattern.permute.xlu0 2
  %677 = vperm.xlu0 %676, %v62
  %v678 = vpop.permute.xlu0 %677
  %680 = vset.pattern.permute.xlu0 2
  %681 = vperm.xlu0 %680, %v63
  %v682 = vpop.permute.xlu0 %681
  %684 = vset.pattern.permute.xlu0 2
  %685 = vperm.xlu0 %684, %v64
  %v686 = vpop.permute.xlu0 %685
  %688 = vset.pattern.permute.xlu0 2
  %689 = vperm.xlu0 %688, %v65
  %v690 = vpop.permute.xlu0 %689
  %692 = vset.pattern.permute.xlu0 2
  %693 = vperm.xlu0 %692, %v66
  %v694 = vpop.permute.xlu0 %693
  %696 = vset.pattern.permute.xlu0 2
  %697 = vperm.xlu0 %696, %v67
  %v698 = vpop.permute.xlu0 %697
  %700 = vset.pattern.permute.xlu0 2
  %701 = vperm.xlu0 %700, %v68
  %v702 = vpop.permute.xlu0 %701
  %704 = vset.pattern.permute.xlu0 2
  %705 = vperm.xlu0 %704, %v69
  %v706 = vpop.permute.xlu0 %705
  %708 = vset.pattern.permute.xlu0 2
  %709 = vperm.xlu0 %708, %v70
  %v710 = vpop.permute.xlu0 %709
  %712 = vset.pattern.permute.xlu0 2
  %713 = vperm.xlu0 %712, %v71
  %v714 = vpop.permute.xlu0 %713
  %716 = vset.pattern.permute.xlu0 2
  %717 = vperm.xlu0 %716, %v72
  %v718 = vpop.permute.xlu0 %717
  %720 = vset.pattern.permute.xlu0 2
  %721 = vperm.xlu0 %720, %v73
  %v722 = vpop.permute.xlu0 %721
  %724 = vset.pattern.permute.xlu0 2
  %725 = vperm.xlu0 %724, %v74
  %v726 = vpop.permute.xlu0 %725
  %728 = vset.pattern.permute.xlu0 3
  %729 = vperm.xlu0 %728, %v59
  %v730 = vpop.permute.xlu0 %729
  %732 = vset.pattern.permute.xlu0 3
  %733 = vperm.xlu0 %732, %v60
  %v734 = vpop.permute.xlu0 %733
  %736 = vset.pattern.permute.xlu0 3
  %737 = vperm.xlu0 %736, %v61
  %v738 = vpop.permute.xlu0 %737
  %740 = vset.pattern.permute.xlu0 3
  %741 = vperm.xlu0 %740, %v62
  %v742 = vpop.permute.xlu0 %741
  %744 = vset.pattern.permute.xlu0 3
  %745 = vperm.xlu0 %744, %v63
  %v746 = vpop.permute.xlu0 %745
  %748 = vset.pattern.permute.xlu0 3
  %749 = vperm.xlu0 %748, %v64
  %v750 = vpop.permute.xlu0 %749
  %752 = vset.pattern.permute.xlu0 3
  %753 = vperm.xlu0 %752, %v65
  %v754 = vpop.permute.xlu0 %753
  %756 = vset.pattern.permute.xlu0 3
  %757 = vperm.xlu0 %756, %v66
  %v758 = vpop.permute.xlu0 %757
  %760 = vset.pattern.permute.xlu0 3
  %761 = vperm.xlu0 %760, %v67
  %v762 = vpop.permute.xlu0 %761
  %764 = vset.pattern.permute.xlu0 3
  %765 = vperm.xlu0 %764, %v68
  %v766 = vpop.permute.xlu0 %765
  %768 = vset.pattern.permute.xlu0 3
  %769 = vperm.xlu0 %768, %v69
  %v770 = vpop.permute.xlu0 %769
  %772 = vset.pattern.permute.xlu0 3
  %773 = vperm.xlu0 %772, %v70
  %v774 = vpop.permute.xlu0 %773
  %776 = vset.pattern.permute.xlu0 3
  %777 = vperm.xlu0 %776, %v71
  %v778 = vpop.permute.xlu0 %777
  %780 = vset.pattern.permute.xlu0 3
  %781 = vperm.xlu0 %780, %v72
  %v782 = vpop.permute.xlu0 %781
  %784 = vset.pattern.permute.xlu0 3
  %785 = vperm.xlu0 %784, %v73
  %v786 = vpop.permute.xlu0 %785
  %788 = vset.pattern.permute.xlu0 3
  %789 = vperm.xlu0 %788, %v74
  %v790 = vpop.permute.xlu0 %789
  %v792 = vsel %vm487, %v666, %v730
  %v793 = vsel %vm487, %v670, %v734
  %v794 = vsel %vm487, %v674, %v738
  %v795 = vsel %vm487, %v678, %v742
  %v796 = vsel %vm487, %v682, %v746
  %v797 = vsel %vm487, %v686, %v750
  %v798 = vsel %vm487, %v690, %v754
  %v799 = vsel %vm487, %v694, %v758
  %v800 = vsel %vm487, %v698, %v762
  %v801 = vsel %vm487, %v702, %v766
  %v802 = vsel %vm487, %v706, %v770
  %v803 = vsel %vm487, %v710, %v774
  %v804 = vsel %vm487, %v714, %v778
  %v805 = vsel %vm487, %v718, %v782
  %v806 = vsel %vm487, %v722, %v786
  %v807 = vsel %vm487, %v726, %v790
  %v808 = vsel %vm469, 0.0, %v792
  %v809 = vsel %vm469, 0.0, %v793
  %v810 = vsel %vm469, 0.0, %v794
  %v811 = vsel %vm469, 0.0, %v795
  %v812 = vsel %vm469, 0.0, %v796
  %v813 = vsel %vm469, 0.0, %v797
  %v814 = vsel %vm469, 0.0, %v798
  %v815 = vsel %vm469, 0.0, %v799
  %v816 = vsel %vm469, 0.0, %v800
  %v817 = vsel %vm469, 0.0, %v801
  %v818 = vsel %vm469, 0.0, %v802
  %v819 = vsel %vm469, 0.0, %v803
  %v820 = vsel %vm469, 0.0, %v804
  %v821 = vsel %vm469, 0.0, %v805
  %v822 = vsel %vm469, 0.0, %v806
  %v823 = vsel %vm469, 0.0, %v807
  %v824 = vmul.f32 %v470, %v648
  %v825 = vmul.f32 %v471, %v649
  %v826 = vmul.f32 %v472, %v650
  %v827 = vmul.f32 %v473, %v651
  %v828 = vmul.f32 %v474, %v652
  %v829 = vmul.f32 %v475, %v653
  %v830 = vmul.f32 %v476, %v654
  %v831 = vmul.f32 %v477, %v655
  %v832 = vmul.f32 %v478, %v656
  %v833 = vmul.f32 %v479, %v657
  %v834 = vmul.f32 %v480, %v658
  %v835 = vmul.f32 %v481, %v659
  %v836 = vmul.f32 %v482, %v660
  %v837 = vmul.f32 %v483, %v661
  %v838 = vmul.f32 %v484, %v662
  %v839 = vmul.f32 %v485, %v663
  %v840 = vpack.c.bf16 %v825, %v824
  %v841 = vpack.c.bf16 %v827, %v826
  %v842 = vpack.c.bf16 %v829, %v828
  %v843 = vpack.c.bf16 %v831, %v830
  %v844 = vpack.c.bf16 %v833, %v832
  %v845 = vpack.c.bf16 %v835, %v834
  %v846 = vpack.c.bf16 %v837, %v836
  %v847 = vpack.c.bf16 %v839, %v838
  %v848 = vmul.f32 %v470, %v808
  %v849 = vmul.f32 %v471, %v809
  %v850 = vmul.f32 %v472, %v810
  %v851 = vmul.f32 %v473, %v811
  %v852 = vmul.f32 %v474, %v812
  %v853 = vmul.f32 %v475, %v813
  %v854 = vmul.f32 %v476, %v814
  %v855 = vmul.f32 %v477, %v815
  %v856 = vmul.f32 %v478, %v816
  %v857 = vmul.f32 %v479, %v817
  %v858 = vmul.f32 %v480, %v818
  %v859 = vmul.f32 %v481, %v819
  %v860 = vmul.f32 %v482, %v820
  %v861 = vmul.f32 %v483, %v821
  %v862 = vmul.f32 %v484, %v822
  %v863 = vmul.f32 %v485, %v823
  %v864 = vpack.c.bf16 %v849, %v848
  %v865 = vpack.c.bf16 %v851, %v850
  %v866 = vpack.c.bf16 %v853, %v852
  %v867 = vpack.c.bf16 %v855, %v854
  %v868 = vpack.c.bf16 %v857, %v856
  %v869 = vpack.c.bf16 %v859, %v858
  %v870 = vpack.c.bf16 %v861, %v860
  %v871 = vpack.c.bf16 %v863, %v862
  %v872 = vld [vmem:[%s2] sm:$0xff]
  %v873 = vld [vmem:[%s2 + $0x8] sm:$0xf]
  %v874 = vld [vmem:[%s2 + $0xc] sm:$0xff]
  %v875 = vld [vmem:[%s2 + $0x14] sm:$0xf]
  %v876 = vld [vmem:[%s2 + $0x18] sm:$0xff]
  %v877 = vld [vmem:[%s2 + $0x20] sm:$0xf]
  %v878 = vld [vmem:[%s2 + $0x24] sm:$0xff]
  %v879 = vld [vmem:[%s2 + $0x2c] sm:$0xf]
  %v880 = vld [vmem:[%s2 + $0x30] sm:$0xff]
  %v881 = vld [vmem:[%s2 + $0x38] sm:$0xf]
  %v882 = vld [vmem:[%s2 + $0x3c] sm:$0xff]
  %v883 = vld [vmem:[%s2 + $0x44] sm:$0xf]
  %v884 = vld [vmem:[%s2 + $0x48] sm:$0xff]
  %v885 = vld [vmem:[%s2 + $0x50] sm:$0xf]
  %v886 = vld [vmem:[%s2 + $0x54] sm:$0xff]
  %v887 = vld [vmem:[%s2 + $0x5c] sm:$0xf]
  %v888 = vld [vmem:[%s3] sm:$0xff]
  %v889 = vld [vmem:[%s3 + $0x8] sm:$0xf]
  %v890 = vld [vmem:[%s3 + $0xc] sm:$0xff]
  %v891 = vld [vmem:[%s3 + $0x14] sm:$0xf]
  %v892 = vld [vmem:[%s3 + $0x18] sm:$0xff]
  %v893 = vld [vmem:[%s3 + $0x20] sm:$0xf]
  %v894 = vld [vmem:[%s3 + $0x24] sm:$0xff]
  %v895 = vld [vmem:[%s3 + $0x2c] sm:$0xf]
  %v896 = vld [vmem:[%s3 + $0x30] sm:$0xff]
  %v897 = vld [vmem:[%s3 + $0x38] sm:$0xf]
  %v898 = vld [vmem:[%s3 + $0x3c] sm:$0xff]
  %v899 = vld [vmem:[%s3 + $0x44] sm:$0xf]
  %v900 = vld [vmem:[%s3 + $0x48] sm:$0xff]
  %v901 = vld [vmem:[%s3 + $0x50] sm:$0xf]
  %v902 = vld [vmem:[%s3 + $0x54] sm:$0xff]
  %v903 = vld [vmem:[%s3 + $0x5c] sm:$0xf]
  %v920 = vunpack.c.l.b16 %v888
  %v921 = vunpack.c.h.b16 %v888
  %v922 = vunpack.c.l.b16 %v889
  %v923 = vunpack.c.l.b16 %v890
  %v924 = vunpack.c.h.b16 %v890
  %v925 = vunpack.c.l.b16 %v891
  %v926 = vunpack.c.l.b16 %v892
  %v927 = vunpack.c.h.b16 %v892
  %v928 = vunpack.c.l.b16 %v893
  %v929 = vunpack.c.l.b16 %v894
  %v930 = vunpack.c.h.b16 %v894
  %v931 = vunpack.c.l.b16 %v895
  %v932 = vunpack.c.l.b16 %v896
  %v933 = vunpack.c.h.b16 %v896
  %v934 = vunpack.c.l.b16 %v897
  %v935 = vunpack.c.l.b16 %v898
  %v936 = vunpack.c.h.b16 %v898
  %v937 = vunpack.c.l.b16 %v899
  %v938 = vunpack.c.l.b16 %v900
  %v939 = vunpack.c.h.b16 %v900
  %v940 = vunpack.c.l.b16 %v901
  %v941 = vunpack.c.l.b16 %v902
  %v942 = vunpack.c.h.b16 %v902
  %v943 = vunpack.c.l.b16 %v903
  %v944 = vpack.c.b16 %v923, %v920
  %v945 = vpack.c.b16 %v924, %v921
  %v946 = vpack.c.b16 %v925, %v922
  %v947 = vpack.c.b16 %v929, %v926
  %v948 = vpack.c.b16 %v930, %v927
  %v949 = vpack.c.b16 %v931, %v928
  %v950 = vpack.c.b16 %v935, %v932
  %v951 = vpack.c.b16 %v936, %v933
  %v952 = vpack.c.b16 %v937, %v934
  %v953 = vpack.c.b16 %v941, %v938
  %v954 = vpack.c.b16 %v942, %v939
  %v955 = vpack.c.b16 %v943, %v940
  %v969 = vsel %vm100, %v864, 0
  %v972 = vsel %vm100, %v865, 0
  %v975 = vsel %vm100, %v866, 0
  %v978 = vsel %vm100, %v867, 0
  %v981 = vsel %vm100, %v868, 0
  %v984 = vsel %vm100, %v869, 0
  %v987 = vsel %vm100, %v870, 0
  %v990 = vsel %vm100, %v871, 0
  %992 = vmatprep.subr.bf16.mxu0 %v945
  %993 = vmatpush1.bf16.msra.mxu0 %v944
  %994 = vmatprep.subr.bf16.mxu0 %v948
  %995 = vmatpush1.bf16.msra.mxu0 %v947
  %996 = vmatprep.subr.bf16.mxu0 %v951
  %997 = vmatpush1.bf16.msra.mxu0 %v950
  %998 = vmatprep.subr.bf16.mxu0 %v954
  %999 = vmatpush1.bf16.msra.mxu0 %v953
  %1000 = vmatprep.subr.bf16.mxu0 0
  %1001 = vmatpush1.bf16.msra.mxu0 0
  %1002 = vmatprep.subr.bf16.mxu0 0
  %1003 = vmatpush1.bf16.msra.mxu0 0
  %1004 = vmatprep.subr.bf16.mxu0 0
  %1005 = vmatpush1.bf16.msra.mxu0 0
  %1006 = vmatprep.subr.bf16.mxu0 0
  %1007 = vmatpush1.bf16.msra.mxu0 0
  %1008 = vmatprep.subr.bf16.mxu0 0
  %1009 = vmatpush1.bf16.msra.mxu0 0
  %1010 = vmatprep.subr.bf16.mxu0 0
  %1011 = vmatpush1.bf16.msra.mxu0 0
  %1012 = vmatprep.subr.bf16.mxu0 0
  %1013 = vmatpush1.bf16.msra.mxu0 0
  %1014 = vmatprep.subr.bf16.mxu0 0
  %1015 = vmatpush1.bf16.msra.mxu0 0
  %1016 = vmatprep.subr.bf16.mxu0 0
  %1017 = vmatpush1.bf16.msra.mxu0 0
  %1018 = vmatprep.subr.bf16.mxu0 0
  %1019 = vmatpush1.bf16.msra.mxu0 0
  %1020 = vmatprep.subr.bf16.mxu0 0
  %1021 = vmatpush1.bf16.msra.mxu0 0
  %1022 = vmatprep.subr.bf16.mxu0 0
  %1023 = vmatpush1.bf16.msra.mxu0 0
  %1024 = vmatprep.mubr.bf16.mxu0 0
  %1025 = vmatmul.mubr.bf16.gmra.mrb[0].mxu0 %v969
  %v1026 = vpop.f32.mrb[0].mxu0
  %v1027 = vadd.f32 0.0, %v1026
  %v1028 = vpop.f32.mrb[0].mxu0
  %v1029 = vadd.f32 0.0, %v1028
  %v1030 = vpop.f32.mrb[0].mxu0
  %v1031 = vadd.f32 0.0, %v1030
  %v1032 = vpop.f32.mrb[0].mxu0
  %v1033 = vadd.f32 0.0, %v1032
  %1034 = vmatprep.mubr.bf16.mxu0 0
  %1035 = vmatmul.mubr.bf16.gmra.mrb[0].mxu0 %v972
  %v1036 = vpop.f32.mrb[0].mxu0
  %v1037 = vadd.f32 0.0, %v1036
  %v1038 = vpop.f32.mrb[0].mxu0
  %v1039 = vadd.f32 0.0, %v1038
  %v1040 = vpop.f32.mrb[0].mxu0
  %v1041 = vadd.f32 0.0, %v1040
  %v1042 = vpop.f32.mrb[0].mxu0
  %v1043 = vadd.f32 0.0, %v1042
  %1044 = vmatprep.mubr.bf16.mxu0 0
  %1045 = vmatmul.mubr.bf16.gmra.mrb[0].mxu0 %v975
  %v1046 = vpop.f32.mrb[0].mxu0
  %v1047 = vadd.f32 0.0, %v1046
  %v1048 = vpop.f32.mrb[0].mxu0
  %v1049 = vadd.f32 0.0, %v1048
  %v1050 = vpop.f32.mrb[0].mxu0
  %v1051 = vadd.f32 0.0, %v1050
  %v1052 = vpop.f32.mrb[0].mxu0
  %v1053 = vadd.f32 0.0, %v1052
  %1054 = vmatprep.mubr.bf16.mxu0 0
  %1055 = vmatmul.mubr.bf16.gmra.mrb[0].mxu0 %v978
  %v1056 = vpop.f32.mrb[0].mxu0
  %v1057 = vadd.f32 0.0, %v1056
  %v1058 = vpop.f32.mrb[0].mxu0
  %v1059 = vadd.f32 0.0, %v1058
  %v1060 = vpop.f32.mrb[0].mxu0
  %v1061 = vadd.f32 0.0, %v1060
  %v1062 = vpop.f32.mrb[0].mxu0
  %v1063 = vadd.f32 0.0, %v1062
  %1064 = vmatprep.mubr.bf16.mxu0 0
  %1065 = vmatmul.mubr.bf16.gmra.mrb[0].mxu0 %v981
  %v1066 = vpop.f32.mrb[0].mxu0
  %v1067 = vadd.f32 0.0, %v1066
  %v1068 = vpop.f32.mrb[0].mxu0
  %v1069 = vadd.f32 0.0, %v1068
  %v1070 = vpop.f32.mrb[0].mxu0
  %v1071 = vadd.f32 0.0, %v1070
  %v1072 = vpop.f32.mrb[0].mxu0
  %v1073 = vadd.f32 0.0, %v1072
  %1074 = vmatprep.mubr.bf16.mxu0 0
  %1075 = vmatmul.mubr.bf16.gmra.mrb[0].mxu0 %v984
  %v1076 = vpop.f32.mrb[0].mxu0
  %v1077 = vadd.f32 0.0, %v1076
  %v1078 = vpop.f32.mrb[0].mxu0
  %v1079 = vadd.f32 0.0, %v1078
  %v1080 = vpop.f32.mrb[0].mxu0
  %v1081 = vadd.f32 0.0, %v1080
  %v1082 = vpop.f32.mrb[0].mxu0
  %v1083 = vadd.f32 0.0, %v1082
  %1084 = vmatprep.mubr.bf16.mxu0 0
  %1085 = vmatmul.mubr.bf16.gmra.mrb[0].mxu0 %v987
  %v1086 = vpop.f32.mrb[0].mxu0
  %v1087 = vadd.f32 0.0, %v1086
  %v1088 = vpop.f32.mrb[0].mxu0
  %v1089 = vadd.f32 0.0, %v1088
  %v1090 = vpop.f32.mrb[0].mxu0
  %v1091 = vadd.f32 0.0, %v1090
  %v1092 = vpop.f32.mrb[0].mxu0
  %v1093 = vadd.f32 0.0, %v1092
  %1094 = vmatprep.mubr.bf16.mxu0 0
  %1095 = vmatmul.mubr.bf16.gmra.mrb[0].mxu0 %v990
  %v1096 = vpop.f32.mrb[0].mxu0
  %v1097 = vadd.f32 0.0, %v1096
  %v1098 = vpop.f32.mrb[0].mxu0
  %v1099 = vadd.f32 0.0, %v1098
  %v1100 = vpop.f32.mrb[0].mxu0
  %v1101 = vadd.f32 0.0, %v1100
  %v1102 = vpop.f32.mrb[0].mxu0
  %v1103 = vadd.f32 0.0, %v1102
  %1104 = vdwg.mxu0
  %1105 = vmatprep.subr.bf16.mxu0 0
  %1106 = vmatpush1.bf16.msra.mxu0 %v946
  %1107 = vmatprep.subr.bf16.mxu0 0
  %1108 = vmatpush1.bf16.msra.mxu0 %v949
  %1109 = vmatprep.subr.bf16.mxu0 0
  %1110 = vmatpush1.bf16.msra.mxu0 %v952
  %1111 = vmatprep.subr.bf16.mxu0 0
  %1112 = vmatpush1.bf16.msra.mxu0 %v955
  %1113 = vmatprep.subr.bf16.mxu0 0
  %1114 = vmatpush1.bf16.msra.mxu0 0
  %1115 = vmatprep.subr.bf16.mxu0 0
  %1116 = vmatpush1.bf16.msra.mxu0 0
  %1117 = vmatprep.subr.bf16.mxu0 0
  %1118 = vmatpush1.bf16.msra.mxu0 0
  %1119 = vmatprep.subr.bf16.mxu0 0
  %1120 = vmatpush1.bf16.msra.mxu0 0
  %1121 = vmatprep.subr.bf16.mxu0 0
  %1122 = vmatpush1.bf16.msra.mxu0 0
  %1123 = vmatprep.subr.bf16.mxu0 0
  %1124 = vmatpush1.bf16.msra.mxu0 0
  %1125 = vmatprep.subr.bf16.mxu0 0
  %1126 = vmatpush1.bf16.msra.mxu0 0
  %1127 = vmatprep.subr.bf16.mxu0 0
  %1128 = vmatpush1.bf16.msra.mxu0 0
  %1129 = vmatprep.subr.bf16.mxu0 0
  %1130 = vmatpush1.bf16.msra.mxu0 0
  %1131 = vmatprep.subr.bf16.mxu0 0
  %1132 = vmatpush1.bf16.msra.mxu0 0
  %1133 = vmatprep.subr.bf16.mxu0 0
  %1134 = vmatpush1.bf16.msra.mxu0 0
  %1135 = vmatprep.subr.bf16.mxu0 0
  %1136 = vmatpush1.bf16.msra.mxu0 0
  %1137 = vmatprep.mubr.bf16.mxu0 0
  %1138 = vmatmul.mubr.bf16.gmra.mrb[0].mxu0 %v969
  %v1139 = vpop.f32.mrb[0].mxu0
  %v1140 = vadd.f32 0.0, %v1139
  %v1141 = vpop.f32.mrb[0].mxu0
  %v1142 = vpop.f32.mrb[0].mxu0
  %v1143 = vadd.f32 0.0, %v1142
  %v1144 = vpop.f32.mrb[0].mxu0
  %1145 = vmatprep.mubr.bf16.mxu0 0
  %1146 = vmatmul.mubr.bf16.gmra.mrb[0].mxu0 %v972
  %v1147 = vpop.f32.mrb[0].mxu0
  %v1148 = vadd.f32 0.0, %v1147
  %v1149 = vpop.f32.mrb[0].mxu0
  %v1150 = vpop.f32.mrb[0].mxu0
  %v1151 = vadd.f32 0.0, %v1150
  %v1152 = vpop.f32.mrb[0].mxu0
  %1153 = vmatprep.mubr.bf16.mxu0 0
  %1154 = vmatmul.mubr.bf16.gmra.mrb[0].mxu0 %v975
  %v1155 = vpop.f32.mrb[0].mxu0
  %v1156 = vadd.f32 0.0, %v1155
  %v1157 = vpop.f32.mrb[0].mxu0
  %v1158 = vpop.f32.mrb[0].mxu0
  %v1159 = vadd.f32 0.0, %v1158
  %v1160 = vpop.f32.mrb[0].mxu0
  %1161 = vmatprep.mubr.bf16.mxu0 0
  %1162 = vmatmul.mubr.bf16.gmra.mrb[0].mxu0 %v978
  %v1163 = vpop.f32.mrb[0].mxu0
  %v1164 = vadd.f32 0.0, %v1163
  %v1165 = vpop.f32.mrb[0].mxu0
  %v1166 = vpop.f32.mrb[0].mxu0
  %v1167 = vadd.f32 0.0, %v1166
  %v1168 = vpop.f32.mrb[0].mxu0
  %1169 = vmatprep.mubr.bf16.mxu0 0
  %1170 = vmatmul.mubr.bf16.gmra.mrb[0].mxu0 %v981
  %v1171 = vpop.f32.mrb[0].mxu0
  %v1172 = vadd.f32 0.0, %v1171
  %v1173 = vpop.f32.mrb[0].mxu0
  %v1174 = vpop.f32.mrb[0].mxu0
  %v1175 = vadd.f32 0.0, %v1174
  %v1176 = vpop.f32.mrb[0].mxu0
  %1177 = vmatprep.mubr.bf16.mxu0 0
  %1178 = vmatmul.mubr.bf16.gmra.mrb[0].mxu0 %v984
  %v1179 = vpop.f32.mrb[0].mxu0
  %v1180 = vadd.f32 0.0, %v1179
  %v1181 = vpop.f32.mrb[0].mxu0
  %v1182 = vpop.f32.mrb[0].mxu0
  %v1183 = vadd.f32 0.0, %v1182
  %v1184 = vpop.f32.mrb[0].mxu0
  %1185 = vmatprep.mubr.bf16.mxu0 0
  %1186 = vmatmul.mubr.bf16.gmra.mrb[0].mxu0 %v987
  %v1187 = vpop.f32.mrb[0].mxu0
  %v1188 = vadd.f32 0.0, %v1187
  %v1189 = vpop.f32.mrb[0].mxu0
  %v1190 = vpop.f32.mrb[0].mxu0
  %v1191 = vadd.f32 0.0, %v1190
  %v1192 = vpop.f32.mrb[0].mxu0
  %1193 = vmatprep.mubr.bf16.mxu0 0
  %1194 = vmatmul.mubr.bf16.gmra.mrb[0].mxu0 %v990
  %v1195 = vpop.f32.mrb[0].mxu0
  %v1196 = vadd.f32 0.0, %v1195
  %v1197 = vpop.f32.mrb[0].mxu0
  %v1198 = vpop.f32.mrb[0].mxu0
  %v1199 = vadd.f32 0.0, %v1198
  %v1200 = vpop.f32.mrb[0].mxu0
  %1201 = vdwg.mxu0
  %v1218 = vunpack.c.l.b16 %v872
  %v1219 = vunpack.c.h.b16 %v872
  %v1220 = vunpack.c.l.b16 %v873
  %v1221 = vunpack.c.l.b16 %v874
  %v1222 = vunpack.c.h.b16 %v874
  %v1223 = vunpack.c.l.b16 %v875
  %v1224 = vunpack.c.l.b16 %v876
  %v1225 = vunpack.c.h.b16 %v876
  %v1226 = vunpack.c.l.b16 %v877
  %v1227 = vunpack.c.l.b16 %v878
  %v1228 = vunpack.c.h.b16 %v878
  %v1229 = vunpack.c.l.b16 %v879
  %v1230 = vunpack.c.l.b16 %v880
  %v1231 = vunpack.c.h.b16 %v880
  %v1232 = vunpack.c.l.b16 %v881
  %v1233 = vunpack.c.l.b16 %v882
  %v1234 = vunpack.c.h.b16 %v882
  %v1235 = vunpack.c.l.b16 %v883
  %v1236 = vunpack.c.l.b16 %v884
  %v1237 = vunpack.c.h.b16 %v884
  %v1238 = vunpack.c.l.b16 %v885
  %v1239 = vunpack.c.l.b16 %v886
  %v1240 = vunpack.c.h.b16 %v886
  %v1241 = vunpack.c.l.b16 %v887
  %v1242 = vpack.c.b16 %v1221, %v1218
  %v1243 = vpack.c.b16 %v1222, %v1219
  %v1244 = vpack.c.b16 %v1223, %v1220
  %v1245 = vpack.c.b16 %v1227, %v1224
  %v1246 = vpack.c.b16 %v1228, %v1225
  %v1247 = vpack.c.b16 %v1229, %v1226
  %v1248 = vpack.c.b16 %v1233, %v1230
  %v1249 = vpack.c.b16 %v1234, %v1231
  %v1250 = vpack.c.b16 %v1235, %v1232
  %v1251 = vpack.c.b16 %v1239, %v1236
  %v1252 = vpack.c.b16 %v1240, %v1237
  %v1253 = vpack.c.b16 %v1241, %v1238
  %v1267 = vsel %vm100, %v840, 0
  %v1270 = vsel %vm100, %v841, 0
  %v1273 = vsel %vm100, %v842, 0
  %v1276 = vsel %vm100, %v843, 0
  %v1279 = vsel %vm100, %v844, 0
  %v1282 = vsel %vm100, %v845, 0
  %v1285 = vsel %vm100, %v846, 0
  %v1288 = vsel %vm100, %v847, 0
  %1290 = vmatprep.subr.bf16.mxu0 %v1243
  %1291 = vmatpush1.bf16.msra.mxu0 %v1242
  %1292 = vmatprep.subr.bf16.mxu0 %v1246
  %1293 = vmatpush1.bf16.msra.mxu0 %v1245
  %1294 = vmatprep.subr.bf16.mxu0 %v1249
  %1295 = vmatpush1.bf16.msra.mxu0 %v1248
  %1296 = vmatprep.subr.bf16.mxu0 %v1252
  %1297 = vmatpush1.bf16.msra.mxu0 %v1251
  %1298 = vmatprep.subr.bf16.mxu0 0
  %1299 = vmatpush1.bf16.msra.mxu0 0
  %1300 = vmatprep.subr.bf16.mxu0 0
  %1301 = vmatpush1.bf16.msra.mxu0 0
  %1302 = vmatprep.subr.bf16.mxu0 0
  %1303 = vmatpush1.bf16.msra.mxu0 0
  %1304 = vmatprep.subr.bf16.mxu0 0
  %1305 = vmatpush1.bf16.msra.mxu0 0
  %1306 = vmatprep.subr.bf16.mxu0 0
  %1307 = vmatpush1.bf16.msra.mxu0 0
  %1308 = vmatprep.subr.bf16.mxu0 0
  %1309 = vmatpush1.bf16.msra.mxu0 0
  %1310 = vmatprep.subr.bf16.mxu0 0
  %1311 = vmatpush1.bf16.msra.mxu0 0
  %1312 = vmatprep.subr.bf16.mxu0 0
  %1313 = vmatpush1.bf16.msra.mxu0 0
  %1314 = vmatprep.subr.bf16.mxu0 0
  %1315 = vmatpush1.bf16.msra.mxu0 0
  %1316 = vmatprep.subr.bf16.mxu0 0
  %1317 = vmatpush1.bf16.msra.mxu0 0
  %1318 = vmatprep.subr.bf16.mxu0 0
  %1319 = vmatpush1.bf16.msra.mxu0 0
  %1320 = vmatprep.subr.bf16.mxu0 0
  %1321 = vmatpush1.bf16.msra.mxu0 0
  %1322 = vmatprep.mubr.bf16.mxu0 0
  %1323 = vmatmul.mubr.bf16.gmra.mrb[0].mxu0 %v1267
  %v1324 = vpop.f32.mrb[0].mxu0
  %v1325 = vadd.f32 %v1027, %v1324
  %v1326 = vpop.f32.mrb[0].mxu0
  %v1327 = vadd.f32 %v1029, %v1326
  %v1328 = vpop.f32.mrb[0].mxu0
  %v1329 = vadd.f32 %v1031, %v1328
  %v1330 = vpop.f32.mrb[0].mxu0
  %v1331 = vadd.f32 %v1033, %v1330
  %1332 = vmatprep.mubr.bf16.mxu0 0
  %1333 = vmatmul.mubr.bf16.gmra.mrb[0].mxu0 %v1270
  %v1334 = vpop.f32.mrb[0].mxu0
  %v1335 = vadd.f32 %v1037, %v1334
  %v1336 = vpop.f32.mrb[0].mxu0
  %v1337 = vadd.f32 %v1039, %v1336
  %v1338 = vpop.f32.mrb[0].mxu0
  %v1339 = vadd.f32 %v1041, %v1338
  %v1340 = vpop.f32.mrb[0].mxu0
  %v1341 = vadd.f32 %v1043, %v1340
  %1342 = vmatprep.mubr.bf16.mxu0 0
  %1343 = vmatmul.mubr.bf16.gmra.mrb[0].mxu0 %v1273
  %v1344 = vpop.f32.mrb[0].mxu0
  %v1345 = vadd.f32 %v1047, %v1344
  %v1346 = vpop.f32.mrb[0].mxu0
  %v1347 = vadd.f32 %v1049, %v1346
  %v1348 = vpop.f32.mrb[0].mxu0
  %v1349 = vadd.f32 %v1051, %v1348
  %v1350 = vpop.f32.mrb[0].mxu0
  %v1351 = vadd.f32 %v1053, %v1350
  %1352 = vmatprep.mubr.bf16.mxu0 0
  %1353 = vmatmul.mubr.bf16.gmra.mrb[0].mxu0 %v1276
  %v1354 = vpop.f32.mrb[0].mxu0
  %v1355 = vadd.f32 %v1057, %v1354
  %v1356 = vpop.f32.mrb[0].mxu0
  %v1357 = vadd.f32 %v1059, %v1356
  %v1358 = vpop.f32.mrb[0].mxu0
  %v1359 = vadd.f32 %v1061, %v1358
  %v1360 = vpop.f32.mrb[0].mxu0
  %v1361 = vadd.f32 %v1063, %v1360
  %1362 = vmatprep.mubr.bf16.mxu0 0
  %1363 = vmatmul.mubr.bf16.gmra.mrb[0].mxu0 %v1279
  %v1364 = vpop.f32.mrb[0].mxu0
  %v1365 = vadd.f32 %v1067, %v1364
  %v1366 = vpop.f32.mrb[0].mxu0
  %v1367 = vadd.f32 %v1069, %v1366
  %v1368 = vpop.f32.mrb[0].mxu0
  %v1369 = vadd.f32 %v1071, %v1368
  %v1370 = vpop.f32.mrb[0].mxu0
  %v1371 = vadd.f32 %v1073, %v1370
  %1372 = vmatprep.mubr.bf16.mxu0 0
  %1373 = vmatmul.mubr.bf16.gmra.mrb[0].mxu0 %v1282
  %v1374 = vpop.f32.mrb[0].mxu0
  %v1375 = vadd.f32 %v1077, %v1374
  %v1376 = vpop.f32.mrb[0].mxu0
  %v1377 = vadd.f32 %v1079, %v1376
  %v1378 = vpop.f32.mrb[0].mxu0
  %v1379 = vadd.f32 %v1081, %v1378
  %v1380 = vpop.f32.mrb[0].mxu0
  %v1381 = vadd.f32 %v1083, %v1380
  %1382 = vmatprep.mubr.bf16.mxu0 0
  %1383 = vmatmul.mubr.bf16.gmra.mrb[0].mxu0 %v1285
  %v1384 = vpop.f32.mrb[0].mxu0
  %v1385 = vadd.f32 %v1087, %v1384
  %v1386 = vpop.f32.mrb[0].mxu0
  %v1387 = vadd.f32 %v1089, %v1386
  %v1388 = vpop.f32.mrb[0].mxu0
  %v1389 = vadd.f32 %v1091, %v1388
  %v1390 = vpop.f32.mrb[0].mxu0
  %v1391 = vadd.f32 %v1093, %v1390
  %1392 = vmatprep.mubr.bf16.mxu0 0
  %1393 = vmatmul.mubr.bf16.gmra.mrb[0].mxu0 %v1288
  %v1394 = vpop.f32.mrb[0].mxu0
  %v1395 = vadd.f32 %v1097, %v1394
  %v1396 = vpop.f32.mrb[0].mxu0
  %v1397 = vadd.f32 %v1099, %v1396
  %v1398 = vpop.f32.mrb[0].mxu0
  %v1399 = vadd.f32 %v1101, %v1398
  %v1400 = vpop.f32.mrb[0].mxu0
  %v1401 = vadd.f32 %v1103, %v1400
  %1402 = vdwg.mxu0
  %1403 = vmatprep.subr.bf16.mxu0 0
  %1404 = vmatpush1.bf16.msra.mxu0 %v1244
  %1405 = vmatprep.subr.bf16.mxu0 0
  %1406 = vmatpush1.bf16.msra.mxu0 %v1247
  %1407 = vmatprep.subr.bf16.mxu0 0
  %1408 = vmatpush1.bf16.msra.mxu0 %v1250
  %1409 = vmatprep.subr.bf16.mxu0 0
  %1410 = vmatpush1.bf16.msra.mxu0 %v1253
  %1411 = vmatprep.subr.bf16.mxu0 0
  %1412 = vmatpush1.bf16.msra.mxu0 0
  %1413 = vmatprep.subr.bf16.mxu0 0
  %1414 = vmatpush1.bf16.msra.mxu0 0
  %1415 = vmatprep.subr.bf16.mxu0 0
  %1416 = vmatpush1.bf16.msra.mxu0 0
  %1417 = vmatprep.subr.bf16.mxu0 0
  %1418 = vmatpush1.bf16.msra.mxu0 0
  %1419 = vmatprep.subr.bf16.mxu0 0
  %1420 = vmatpush1.bf16.msra.mxu0 0
  %1421 = vmatprep.subr.bf16.mxu0 0
  %1422 = vmatpush1.bf16.msra.mxu0 0
  %1423 = vmatprep.subr.bf16.mxu0 0
  %1424 = vmatpush1.bf16.msra.mxu0 0
  %1425 = vmatprep.subr.bf16.mxu0 0
  %1426 = vmatpush1.bf16.msra.mxu0 0
  %1427 = vmatprep.subr.bf16.mxu0 0
  %1428 = vmatpush1.bf16.msra.mxu0 0
  %1429 = vmatprep.subr.bf16.mxu0 0
  %1430 = vmatpush1.bf16.msra.mxu0 0
  %1431 = vmatprep.subr.bf16.mxu0 0
  %1432 = vmatpush1.bf16.msra.mxu0 0
  %1433 = vmatprep.subr.bf16.mxu0 0
  %1434 = vmatpush1.bf16.msra.mxu0 0
  %1435 = vmatprep.mubr.bf16.mxu0 0
  %1436 = vmatmul.mubr.bf16.gmra.mrb[0].mxu0 %v1267
  %v1437 = vpop.f32.mrb[0].mxu0
  %v1438 = vadd.f32 %v1140, %v1437
  %v1439 = vpop.f32.mrb[0].mxu0
  %v1440 = vpop.f32.mrb[0].mxu0
  %v1441 = vadd.f32 %v1143, %v1440
  %v1442 = vpop.f32.mrb[0].mxu0
  %1443 = vmatprep.mubr.bf16.mxu0 0
  %1444 = vmatmul.mubr.bf16.gmra.mrb[0].mxu0 %v1270
  %v1445 = vpop.f32.mrb[0].mxu0
  %v1446 = vadd.f32 %v1148, %v1445
  %v1447 = vpop.f32.mrb[0].mxu0
  %v1448 = vpop.f32.mrb[0].mxu0
  %v1449 = vadd.f32 %v1151, %v1448
  %v1450 = vpop.f32.mrb[0].mxu0
  %1451 = vmatprep.mubr.bf16.mxu0 0
  %1452 = vmatmul.mubr.bf16.gmra.mrb[0].mxu0 %v1273
  %v1453 = vpop.f32.mrb[0].mxu0
  %v1454 = vadd.f32 %v1156, %v1453
  %v1455 = vpop.f32.mrb[0].mxu0
  %v1456 = vpop.f32.mrb[0].mxu0
  %v1457 = vadd.f32 %v1159, %v1456
  %v1458 = vpop.f32.mrb[0].mxu0
  %1459 = vmatprep.mubr.bf16.mxu0 0
  %1460 = vmatmul.mubr.bf16.gmra.mrb[0].mxu0 %v1276
  %v1461 = vpop.f32.mrb[0].mxu0
  %v1462 = vadd.f32 %v1164, %v1461
  %v1463 = vpop.f32.mrb[0].mxu0
  %v1464 = vpop.f32.mrb[0].mxu0
  %v1465 = vadd.f32 %v1167, %v1464
  %v1466 = vpop.f32.mrb[0].mxu0
  %1467 = vmatprep.mubr.bf16.mxu0 0
  %1468 = vmatmul.mubr.bf16.gmra.mrb[0].mxu0 %v1279
  %v1469 = vpop.f32.mrb[0].mxu0
  %v1470 = vadd.f32 %v1172, %v1469
  %v1471 = vpop.f32.mrb[0].mxu0
  %v1472 = vpop.f32.mrb[0].mxu0
  %v1473 = vadd.f32 %v1175, %v1472
  %v1474 = vpop.f32.mrb[0].mxu0
  %1475 = vmatprep.mubr.bf16.mxu0 0
  %1476 = vmatmul.mubr.bf16.gmra.mrb[0].mxu0 %v1282
  %v1477 = vpop.f32.mrb[0].mxu0
  %v1478 = vadd.f32 %v1180, %v1477
  %v1479 = vpop.f32.mrb[0].mxu0
  %v1480 = vpop.f32.mrb[0].mxu0
  %v1481 = vadd.f32 %v1183, %v1480
  %v1482 = vpop.f32.mrb[0].mxu0
  %1483 = vmatprep.mubr.bf16.mxu0 0
  %1484 = vmatmul.mubr.bf16.gmra.mrb[0].mxu0 %v1285
  %v1485 = vpop.f32.mrb[0].mxu0
  %v1486 = vadd.f32 %v1188, %v1485
  %v1487 = vpop.f32.mrb[0].mxu0
  %v1488 = vpop.f32.mrb[0].mxu0
  %v1489 = vadd.f32 %v1191, %v1488
  %v1490 = vpop.f32.mrb[0].mxu0
  %1491 = vmatprep.mubr.bf16.mxu0 0
  %1492 = vmatmul.mubr.bf16.gmra.mrb[0].mxu0 %v1288
  %v1493 = vpop.f32.mrb[0].mxu0
  %v1494 = vadd.f32 %v1196, %v1493
  %v1495 = vpop.f32.mrb[0].mxu0
  %v1496 = vpop.f32.mrb[0].mxu0
  %v1497 = vadd.f32 %v1199, %v1496
  %v1498 = vpop.f32.mrb[0].mxu0
  %1499 = vdwg.mxu0
  %v1500 = vld [vmem:[%s4] sm:$0x7]
  %v1502 = vlaneseq
  %v1503 = vshrl.u32 %v1502, 7
  %v1504 = vsub.s32 0, %v1503
  %v1505 = vrot.slane %v1500, %v1504
  %v1506 = vlaneseq
  %v1507 = vshrl.u32 %v1506, 7
  %v1508 = vsub.s32 1, %v1507
  %v1509 = vrot.slane %v1500, %v1508
  %v1510 = vlaneseq
  %v1511 = vshrl.u32 %v1510, 7
  %v1512 = vsub.s32 2, %v1511
  %v1513 = vrot.slane %v1500, %v1512
  %v1517 = vadd.f32 %v1325, %v1505
  %v1518 = vadd.f32 %v1327, %v1509
  %v1519 = vadd.f32 %v1438, %v1513
  %v1520 = vadd.f32 %v1329, %v1505
  %v1521 = vadd.f32 %v1331, %v1509
  %v1522 = vadd.f32 %v1441, %v1513
  %v1523 = vadd.f32 %v1335, %v1505
  %v1524 = vadd.f32 %v1337, %v1509
  %v1525 = vadd.f32 %v1446, %v1513
  %v1526 = vadd.f32 %v1339, %v1505
  %v1527 = vadd.f32 %v1341, %v1509
  %v1528 = vadd.f32 %v1449, %v1513
  %v1529 = vadd.f32 %v1345, %v1505
  %v1530 = vadd.f32 %v1347, %v1509
  %v1531 = vadd.f32 %v1454, %v1513
  %v1532 = vadd.f32 %v1349, %v1505
  %v1533 = vadd.f32 %v1351, %v1509
  %v1534 = vadd.f32 %v1457, %v1513
  %v1535 = vadd.f32 %v1355, %v1505
  %v1536 = vadd.f32 %v1357, %v1509
  %v1537 = vadd.f32 %v1462, %v1513
  %v1538 = vadd.f32 %v1359, %v1505
  %v1539 = vadd.f32 %v1361, %v1509
  %v1540 = vadd.f32 %v1465, %v1513
  %v1541 = vadd.f32 %v1365, %v1505
  %v1542 = vadd.f32 %v1367, %v1509
  %v1543 = vadd.f32 %v1470, %v1513
  %v1544 = vadd.f32 %v1369, %v1505
  %v1545 = vadd.f32 %v1371, %v1509
  %v1546 = vadd.f32 %v1473, %v1513
  %v1547 = vadd.f32 %v1375, %v1505
  %v1548 = vadd.f32 %v1377, %v1509
  %v1549 = vadd.f32 %v1478, %v1513
  %v1550 = vadd.f32 %v1379, %v1505
  %v1551 = vadd.f32 %v1381, %v1509
  %v1552 = vadd.f32 %v1481, %v1513
  %v1553 = vadd.f32 %v1385, %v1505
  %v1554 = vadd.f32 %v1387, %v1509
  %v1555 = vadd.f32 %v1486, %v1513
  %v1556 = vadd.f32 %v1389, %v1505
  %v1557 = vadd.f32 %v1391, %v1509
  %v1558 = vadd.f32 %v1489, %v1513
  %v1559 = vadd.f32 %v1395, %v1505
  %v1560 = vadd.f32 %v1397, %v1509
  %v1561 = vadd.f32 %v1494, %v1513
  %v1562 = vadd.f32 %v1399, %v1505
  %v1563 = vadd.f32 %v1401, %v1509
  %v1564 = vadd.f32 %v1497, %v1513
  %vm1565 = vcmp.gt.f32.partialorder %v1517, 0.0
  %vm1566 = vcmp.gt.f32.partialorder %v1518, 0.0
  %vm1567 = vcmp.gt.f32.partialorder %v1519, 0.0
  %vm1568 = vcmp.gt.f32.partialorder %v1520, 0.0
  %vm1569 = vcmp.gt.f32.partialorder %v1521, 0.0
  %vm1570 = vcmp.gt.f32.partialorder %v1522, 0.0
  %vm1571 = vcmp.gt.f32.partialorder %v1523, 0.0
  %vm1572 = vcmp.gt.f32.partialorder %v1524, 0.0
  %vm1573 = vcmp.gt.f32.partialorder %v1525, 0.0
  %vm1574 = vcmp.gt.f32.partialorder %v1526, 0.0
  %vm1575 = vcmp.gt.f32.partialorder %v1527, 0.0
  %vm1576 = vcmp.gt.f32.partialorder %v1528, 0.0
  %vm1577 = vcmp.gt.f32.partialorder %v1529, 0.0
  %vm1578 = vcmp.gt.f32.partialorder %v1530, 0.0
  %vm1579 = vcmp.gt.f32.partialorder %v1531, 0.0
  %vm1580 = vcmp.gt.f32.partialorder %v1532, 0.0
  %vm1581 = vcmp.gt.f32.partialorder %v1533, 0.0
  %vm1582 = vcmp.gt.f32.partialorder %v1534, 0.0
  %vm1583 = vcmp.gt.f32.partialorder %v1535, 0.0
  %vm1584 = vcmp.gt.f32.partialorder %v1536, 0.0
  %vm1585 = vcmp.gt.f32.partialorder %v1537, 0.0
  %vm1586 = vcmp.gt.f32.partialorder %v1538, 0.0
  %vm1587 = vcmp.gt.f32.partialorder %v1539, 0.0
  %vm1588 = vcmp.gt.f32.partialorder %v1540, 0.0
  %vm1589 = vcmp.gt.f32.partialorder %v1541, 0.0
  %vm1590 = vcmp.gt.f32.partialorder %v1542, 0.0
  %vm1591 = vcmp.gt.f32.partialorder %v1543, 0.0
  %vm1592 = vcmp.gt.f32.partialorder %v1544, 0.0
  %vm1593 = vcmp.gt.f32.partialorder %v1545, 0.0
  %vm1594 = vcmp.gt.f32.partialorder %v1546, 0.0
  %vm1595 = vcmp.gt.f32.partialorder %v1547, 0.0
  %vm1596 = vcmp.gt.f32.partialorder %v1548, 0.0
  %vm1597 = vcmp.gt.f32.partialorder %v1549, 0.0
  %vm1598 = vcmp.gt.f32.partialorder %v1550, 0.0
  %vm1599 = vcmp.gt.f32.partialorder %v1551, 0.0
  %vm1600 = vcmp.gt.f32.partialorder %v1552, 0.0
  %vm1601 = vcmp.gt.f32.partialorder %v1553, 0.0
  %vm1602 = vcmp.gt.f32.partialorder %v1554, 0.0
  %vm1603 = vcmp.gt.f32.partialorder %v1555, 0.0
  %vm1604 = vcmp.gt.f32.partialorder %v1556, 0.0
  %vm1605 = vcmp.gt.f32.partialorder %v1557, 0.0
  %vm1606 = vcmp.gt.f32.partialorder %v1558, 0.0
  %vm1607 = vcmp.gt.f32.partialorder %v1559, 0.0
  %vm1608 = vcmp.gt.f32.partialorder %v1560, 0.0
  %vm1609 = vcmp.gt.f32.partialorder %v1561, 0.0
  %vm1610 = vcmp.gt.f32.partialorder %v1562, 0.0
  %vm1611 = vcmp.gt.f32.partialorder %v1563, 0.0
  %vm1612 = vcmp.gt.f32.partialorder %v1564, 0.0
  %v1613 = vmul.f32 %v1517, 0.01
  %v1614 = vmul.f32 %v1518, 0.01
  %v1615 = vmul.f32 %v1519, 0.01
  %v1616 = vmul.f32 %v1520, 0.01
  %v1617 = vmul.f32 %v1521, 0.01
  %v1618 = vmul.f32 %v1522, 0.01
  %v1619 = vmul.f32 %v1523, 0.01
  %v1620 = vmul.f32 %v1524, 0.01
  %v1621 = vmul.f32 %v1525, 0.01
  %v1622 = vmul.f32 %v1526, 0.01
  %v1623 = vmul.f32 %v1527, 0.01
  %v1624 = vmul.f32 %v1528, 0.01
  %v1625 = vmul.f32 %v1529, 0.01
  %v1626 = vmul.f32 %v1530, 0.01
  %v1627 = vmul.f32 %v1531, 0.01
  %v1628 = vmul.f32 %v1532, 0.01
  %v1629 = vmul.f32 %v1533, 0.01
  %v1630 = vmul.f32 %v1534, 0.01
  %v1631 = vmul.f32 %v1535, 0.01
  %v1632 = vmul.f32 %v1536, 0.01
  %v1633 = vmul.f32 %v1537, 0.01
  %v1634 = vmul.f32 %v1538, 0.01
  %v1635 = vmul.f32 %v1539, 0.01
  %v1636 = vmul.f32 %v1540, 0.01
  %v1637 = vmul.f32 %v1541, 0.01
  %v1638 = vmul.f32 %v1542, 0.01
  %v1639 = vmul.f32 %v1543, 0.01
  %v1640 = vmul.f32 %v1544, 0.01
  %v1641 = vmul.f32 %v1545, 0.01
  %v1642 = vmul.f32 %v1546, 0.01
  %v1643 = vmul.f32 %v1547, 0.01
  %v1644 = vmul.f32 %v1548, 0.01
  %v1645 = vmul.f32 %v1549, 0.01
  %v1646 = vmul.f32 %v1550, 0.01
  %v1647 = vmul.f32 %v1551, 0.01
  %v1648 = vmul.f32 %v1552, 0.01
  %v1649 = vmul.f32 %v1553, 0.01
  %v1650 = vmul.f32 %v1554, 0.01
  %v1651 = vmul.f32 %v1555, 0.01
  %v1652 = vmul.f32 %v1556, 0.01
  %v1653 = vmul.f32 %v1557, 0.01
  %v1654 = vmul.f32 %v1558, 0.01
  %v1655 = vmul.f32 %v1559, 0.01
  %v1656 = vmul.f32 %v1560, 0.01
  %v1657 = vmul.f32 %v1561, 0.01
  %v1658 = vmul.f32 %v1562, 0.01
  %v1659 = vmul.f32 %v1563, 0.01
  %v1660 = vmul.f32 %v1564, 0.01
  %v1661 = vsel %vm1565, %v1517, %v1613
  %v1662 = vsel %vm1566, %v1518, %v1614
  %v1663 = vsel %vm1567, %v1519, %v1615
  %v1664 = vsel %vm1568, %v1520, %v1616
  %v1665 = vsel %vm1569, %v1521, %v1617
  %v1666 = vsel %vm1570, %v1522, %v1618
  %v1667 = vsel %vm1571, %v1523, %v1619
  %v1668 = vsel %vm1572, %v1524, %v1620
  %v1669 = vsel %vm1573, %v1525, %v1621
  %v1670 = vsel %vm1574, %v1526, %v1622
  %v1671 = vsel %vm1575, %v1527, %v1623
  %v1672 = vsel %vm1576, %v1528, %v1624
  %v1673 = vsel %vm1577, %v1529, %v1625
  %v1674 = vsel %vm1578, %v1530, %v1626
  %v1675 = vsel %vm1579, %v1531, %v1627
  %v1676 = vsel %vm1580, %v1532, %v1628
  %v1677 = vsel %vm1581, %v1533, %v1629
  %v1678 = vsel %vm1582, %v1534, %v1630
  %v1679 = vsel %vm1583, %v1535, %v1631
  %v1680 = vsel %vm1584, %v1536, %v1632
  %v1681 = vsel %vm1585, %v1537, %v1633
  %v1682 = vsel %vm1586, %v1538, %v1634
  %v1683 = vsel %vm1587, %v1539, %v1635
  %v1684 = vsel %vm1588, %v1540, %v1636
  %v1685 = vsel %vm1589, %v1541, %v1637
  %v1686 = vsel %vm1590, %v1542, %v1638
  %v1687 = vsel %vm1591, %v1543, %v1639
  %v1688 = vsel %vm1592, %v1544, %v1640
  %v1689 = vsel %vm1593, %v1545, %v1641
  %v1690 = vsel %vm1594, %v1546, %v1642
  %v1691 = vsel %vm1595, %v1547, %v1643
  %v1692 = vsel %vm1596, %v1548, %v1644
  %v1693 = vsel %vm1597, %v1549, %v1645
  %v1694 = vsel %vm1598, %v1550, %v1646
  %v1695 = vsel %vm1599, %v1551, %v1647
  %v1696 = vsel %vm1600, %v1552, %v1648
  %v1697 = vsel %vm1601, %v1553, %v1649
  %v1698 = vsel %vm1602, %v1554, %v1650
  %v1699 = vsel %vm1603, %v1555, %v1651
  %v1700 = vsel %vm1604, %v1556, %v1652
  %v1701 = vsel %vm1605, %v1557, %v1653
  %v1702 = vsel %vm1606, %v1558, %v1654
  %v1703 = vsel %vm1607, %v1559, %v1655
  %v1704 = vsel %vm1608, %v1560, %v1656
  %v1705 = vsel %vm1609, %v1561, %v1657
  %v1706 = vsel %vm1610, %v1562, %v1658
  %v1707 = vsel %vm1611, %v1563, %v1659
  %v1708 = vsel %vm1612, %v1564, %v1660
  %v1709 = vpack.c.bf16 %v1664, %v1661
  %v1710 = vpack.c.bf16 %v1665, %v1662
  %v1711 = vpack.c.bf16 %v1666, %v1663
  %v1712 = vpack.c.bf16 %v1670, %v1667
  %v1713 = vpack.c.bf16 %v1671, %v1668
  %v1714 = vpack.c.bf16 %v1672, %v1669
  %v1715 = vpack.c.bf16 %v1676, %v1673
  %v1716 = vpack.c.bf16 %v1677, %v1674
  %v1717 = vpack.c.bf16 %v1678, %v1675
  %v1718 = vpack.c.bf16 %v1682, %v1679
  %v1719 = vpack.c.bf16 %v1683, %v1680
  %v1720 = vpack.c.bf16 %v1684, %v1681
  %v1721 = vpack.c.bf16 %v1688, %v1685
  %v1722 = vpack.c.bf16 %v1689, %v1686
  %v1723 = vpack.c.bf16 %v1690, %v1687
  %v1724 = vpack.c.bf16 %v1694, %v1691
  %v1725 = vpack.c.bf16 %v1695, %v1692
  %v1726 = vpack.c.bf16 %v1696, %v1693
  %v1727 = vpack.c.bf16 %v1700, %v1697
  %v1728 = vpack.c.bf16 %v1701, %v1698
  %v1729 = vpack.c.bf16 %v1702, %v1699
  %v1730 = vpack.c.bf16 %v1706, %v1703
  %v1731 = vpack.c.bf16 %v1707, %v1704
  %v1732 = vpack.c.bf16 %v1708, %v1705
  %v1733 = vld [vmem:[%s5] sm:$0xf]
  %v1734 = vld [vmem:[%s5 + $0x4] sm:$0xf]
  %v1735 = vld [vmem:[%s5 + $0x8] sm:$0xf]
  %v1736 = vld [vmem:[%s5 + $0xc] sm:$0xf]
  %v1737 = vld [vmem:[%s5 + $0x10] sm:$0xf]
  %v1738 = vld [vmem:[%s5 + $0x14] sm:$0xf]
  %v1739 = vld [vmem:[%s5 + $0x18] sm:$0xf]
  %v1740 = vld [vmem:[%s5 + $0x1c] sm:$0xf]
  %v1741 = vld [vmem:[%s5 + $0x20] sm:$0xf]
  %v1742 = vld [vmem:[%s5 + $0x24] sm:$0xf]
  %v1743 = vld [vmem:[%s5 + $0x28] sm:$0xf]
  %v1744 = vld [vmem:[%s5 + $0x2c] sm:$0xf]
  %v1745 = vld [vmem:[%s5 + $0x30] sm:$0xf]
  %v1746 = vld [vmem:[%s5 + $0x34] sm:$0xf]
  %v1747 = vld [vmem:[%s5 + $0x38] sm:$0xf]
  %v1748 = vld [vmem:[%s5 + $0x3c] sm:$0xf]
  %v1749 = vld [vmem:[%s5 + $0x40] sm:$0xf]
  %v1750 = vld [vmem:[%s5 + $0x44] sm:$0xf]
  %v1751 = vld [vmem:[%s5 + $0x48] sm:$0xf]
  %v1752 = vld [vmem:[%s5 + $0x4c] sm:$0xf]
  %v1753 = vld [vmem:[%s5 + $0x50] sm:$0xf]
  %v1754 = vld [vmem:[%s5 + $0x54] sm:$0xf]
  %v1755 = vld [vmem:[%s5 + $0x58] sm:$0xf]
  %v1756 = vld [vmem:[%s5 + $0x5c] sm:$0xf]
  %v1757 = vld [vmem:[%s5 + $0x60] sm:$0xf]
  %v1758 = vld [vmem:[%s5 + $0x64] sm:$0xf]
  %v1759 = vld [vmem:[%s5 + $0x68] sm:$0xf]
  %v1760 = vld [vmem:[%s5 + $0x6c] sm:$0xf]
  %v1761 = vld [vmem:[%s5 + $0x70] sm:$0xf]
  %v1762 = vld [vmem:[%s5 + $0x74] sm:$0xf]
  %v1763 = vld [vmem:[%s5 + $0x78] sm:$0xf]
  %v1764 = vld [vmem:[%s5 + $0x7c] sm:$0xf]
  %v1765 = vld [vmem:[%s5 + $0x80] sm:$0xf]
  %v1766 = vld [vmem:[%s5 + $0x84] sm:$0xf]
  %v1767 = vld [vmem:[%s5 + $0x88] sm:$0xf]
  %v1768 = vld [vmem:[%s5 + $0x8c] sm:$0xf]
  %v1769 = vld [vmem:[%s5 + $0x90] sm:$0xf]
  %v1770 = vld [vmem:[%s5 + $0x94] sm:$0xf]
  %v1771 = vld [vmem:[%s5 + $0x98] sm:$0xf]
  %v1772 = vld [vmem:[%s5 + $0x9c] sm:$0xf]
  %v1773 = vld [vmem:[%s5 + $0xa0] sm:$0xf]
  %v1774 = vld [vmem:[%s5 + $0xa4] sm:$0xf]
  %v1775 = vld [vmem:[%s5 + $0xa8] sm:$0xf]
  %v1776 = vld [vmem:[%s5 + $0xac] sm:$0xf]
  %v1777 = vld [vmem:[%s5 + $0xb0] sm:$0xf]
  %v1778 = vld [vmem:[%s5 + $0xb4] sm:$0xf]
  %v1779 = vld [vmem:[%s5 + $0xb8] sm:$0xf]
  %v1780 = vld [vmem:[%s5 + $0xbc] sm:$0xf]
  %v1781 = vld [vmem:[%s6] sm:$0x1]
  %v1783 = vlaneseq
  %v1784 = vshrl.u32 %v1783, 7
  %v1785 = vsub.s32 0, %v1784
  %v1786 = vrot.slane %v1781, %v1785
  %v1836 = vunpack.c.l.b16 %v1733
  %v1837 = vunpack.c.l.b16 %v1734
  %v1838 = vunpack.c.l.b16 %v1735
  %v1839 = vunpack.c.l.b16 %v1736
  %v1840 = vunpack.c.l.b16 %v1737
  %v1841 = vunpack.c.l.b16 %v1738
  %v1842 = vunpack.c.l.b16 %v1739
  %v1843 = vunpack.c.l.b16 %v1740
  %v1844 = vunpack.c.l.b16 %v1741
  %v1845 = vunpack.c.l.b16 %v1742
  %v1846 = vunpack.c.l.b16 %v1743
  %v1847 = vunpack.c.l.b16 %v1744
  %v1848 = vunpack.c.l.b16 %v1745
  %v1849 = vunpack.c.l.b16 %v1746
  %v1850 = vunpack.c.l.b16 %v1747
  %v1851 = vunpack.c.l.b16 %v1748
  %v1852 = vunpack.c.l.b16 %v1749
  %v1853 = vunpack.c.l.b16 %v1750
  %v1854 = vunpack.c.l.b16 %v1751
  %v1855 = vunpack.c.l.b16 %v1752
  %v1856 = vunpack.c.l.b16 %v1753
  %v1857 = vunpack.c.l.b16 %v1754
  %v1858 = vunpack.c.l.b16 %v1755
  %v1859 = vunpack.c.l.b16 %v1756
  %v1860 = vunpack.c.l.b16 %v1757
  %v1861 = vunpack.c.l.b16 %v1758
  %v1862 = vunpack.c.l.b16 %v1759
  %v1863 = vunpack.c.l.b16 %v1760
  %v1864 = vunpack.c.l.b16 %v1761
  %v1865 = vunpack.c.l.b16 %v1762
  %v1866 = vunpack.c.l.b16 %v1763
  %v1867 = vunpack.c.l.b16 %v1764
  %v1868 = vunpack.c.l.b16 %v1765
  %v1869 = vunpack.c.l.b16 %v1766
  %v1870 = vunpack.c.l.b16 %v1767
  %v1871 = vunpack.c.l.b16 %v1768
  %v1872 = vunpack.c.l.b16 %v1769
  %v1873 = vunpack.c.l.b16 %v1770
  %v1874 = vunpack.c.l.b16 %v1771
  %v1875 = vunpack.c.l.b16 %v1772
  %v1876 = vunpack.c.l.b16 %v1773
  %v1877 = vunpack.c.l.b16 %v1774
  %v1878 = vunpack.c.l.b16 %v1775
  %v1879 = vunpack.c.l.b16 %v1776
  %v1880 = vunpack.c.l.b16 %v1777
  %v1881 = vunpack.c.l.b16 %v1778
  %v1882 = vunpack.c.l.b16 %v1779
  %v1883 = vunpack.c.l.b16 %v1780
  %v1884 = vpack.c.b16 %v1837, %v1836
  %v1885 = vpack.c.b16 %v1839, %v1838
  %v1886 = vpack.c.b16 %v1841, %v1840
  %v1887 = vpack.c.b16 %v1843, %v1842
  %v1888 = vpack.c.b16 %v1845, %v1844
  %v1889 = vpack.c.b16 %v1847, %v1846
  %v1890 = vpack.c.b16 %v1849, %v1848
  %v1891 = vpack.c.b16 %v1851, %v1850
  %v1892 = vpack.c.b16 %v1853, %v1852
  %v1893 = vpack.c.b16 %v1855, %v1854
  %v1894 = vpack.c.b16 %v1857, %v1856
  %v1895 = vpack.c.b16 %v1859, %v1858
  %v1896 = vpack.c.b16 %v1861, %v1860
  %v1897 = vpack.c.b16 %v1863, %v1862
  %v1898 = vpack.c.b16 %v1865, %v1864
  %v1899 = vpack.c.b16 %v1867, %v1866
  %v1900 = vpack.c.b16 %v1869, %v1868
  %v1901 = vpack.c.b16 %v1871, %v1870
  %v1902 = vpack.c.b16 %v1873, %v1872
  %v1903 = vpack.c.b16 %v1875, %v1874
  %v1904 = vpack.c.b16 %v1877, %v1876
  %v1905 = vpack.c.b16 %v1879, %v1878
  %v1906 = vpack.c.b16 %v1881, %v1880
  %v1907 = vpack.c.b16 %v1883, %v1882
  %1932 = vmatprep.subr.bf16.mxu0 0
  %1933 = vmatpush1.bf16.msra.mxu0 %v1884
  %1934 = vmatprep.subr.bf16.mxu0 0
  %1935 = vmatpush1.bf16.msra.mxu0 %v1885
  %1936 = vmatprep.subr.bf16.mxu0 0
  %1937 = vmatpush1.bf16.msra.mxu0 %v1886
  %1938 = vmatprep.subr.bf16.mxu0 0
  %1939 = vmatpush1.bf16.msra.mxu0 %v1887
  %1940 = vmatprep.subr.bf16.mxu0 0
  %1941 = vmatpush1.bf16.msra.mxu0 %v1888
  %1942 = vmatprep.subr.bf16.mxu0 0
  %1943 = vmatpush1.bf16.msra.mxu0 %v1889
  %1944 = vmatprep.subr.bf16.mxu0 0
  %1945 = vmatpush1.bf16.msra.mxu0 %v1890
  %1946 = vmatprep.subr.bf16.mxu0 0
  %1947 = vmatpush1.bf16.msra.mxu0 %v1891
  %1948 = vmatprep.subr.bf16.mxu0 0
  %1949 = vmatpush1.bf16.msra.mxu0 %v1892
  %1950 = vmatprep.subr.bf16.mxu0 0
  %1951 = vmatpush1.bf16.msra.mxu0 %v1893
  %1952 = vmatprep.subr.bf16.mxu0 0
  %1953 = vmatpush1.bf16.msra.mxu0 %v1894
  %1954 = vmatprep.subr.bf16.mxu0 0
  %1955 = vmatpush1.bf16.msra.mxu0 %v1895
  %1956 = vmatprep.subr.bf16.mxu0 0
  %1957 = vmatpush1.bf16.msra.mxu0 %v1896
  %1958 = vmatprep.subr.bf16.mxu0 0
  %1959 = vmatpush1.bf16.msra.mxu0 %v1897
  %1960 = vmatprep.subr.bf16.mxu0 0
  %1961 = vmatpush1.bf16.msra.mxu0 %v1898
  %1962 = vmatprep.subr.bf16.mxu0 0
  %1963 = vmatpush1.bf16.msra.mxu0 %v1899
  %1964 = vmatprep.mubr.bf16.mxu0 %v1710
  %1965 = vmatmul.mubr.bf16.gmra.mrb[0].mxu0 %v1709
  %v1966 = vpop.f32.mrb[0].mxu0
  %v1967 = vadd.f32 %v1786, %v1966
  %v1968 = vpop.f32.mrb[0].mxu0
  %v1969 = vpop.f32.mrb[0].mxu0
  %v1970 = vadd.f32 %v1786, %v1969
  %v1971 = vpop.f32.mrb[0].mxu0
  %1972 = vmatprep.mubr.bf16.mxu0 %v1713
  %1973 = vmatmul.mubr.bf16.gmra.mrb[0].mxu0 %v1712
  %v1974 = vpop.f32.mrb[0].mxu0
  %v1975 = vadd.f32 %v1786, %v1974
  %v1976 = vpop.f32.mrb[0].mxu0
  %v1977 = vpop.f32.mrb[0].mxu0
  %v1978 = vadd.f32 %v1786, %v1977
  %v1979 = vpop.f32.mrb[0].mxu0
  %1980 = vmatprep.mubr.bf16.mxu0 %v1716
  %1981 = vmatmul.mubr.bf16.gmra.mrb[0].mxu0 %v1715
  %v1982 = vpop.f32.mrb[0].mxu0
  %v1983 = vadd.f32 %v1786, %v1982
  %v1984 = vpop.f32.mrb[0].mxu0
  %v1985 = vpop.f32.mrb[0].mxu0
  %v1986 = vadd.f32 %v1786, %v1985
  %v1987 = vpop.f32.mrb[0].mxu0
  %1988 = vmatprep.mubr.bf16.mxu0 %v1719
  %1989 = vmatmul.mubr.bf16.gmra.mrb[0].mxu0 %v1718
  %v1990 = vpop.f32.mrb[0].mxu0
  %v1991 = vadd.f32 %v1786, %v1990
  %v1992 = vpop.f32.mrb[0].mxu0
  %v1993 = vpop.f32.mrb[0].mxu0
  %v1994 = vadd.f32 %v1786, %v1993
  %v1995 = vpop.f32.mrb[0].mxu0
  %1996 = vmatprep.mubr.bf16.mxu0 %v1722
  %1997 = vmatmul.mubr.bf16.gmra.mrb[0].mxu0 %v1721
  %v1998 = vpop.f32.mrb[0].mxu0
  %v1999 = vadd.f32 %v1786, %v1998
  %v2000 = vpop.f32.mrb[0].mxu0
  %v2001 = vpop.f32.mrb[0].mxu0
  %v2002 = vadd.f32 %v1786, %v2001
  %v2003 = vpop.f32.mrb[0].mxu0
  %2004 = vmatprep.mubr.bf16.mxu0 %v1725
  %2005 = vmatmul.mubr.bf16.gmra.mrb[0].mxu0 %v1724
  %v2006 = vpop.f32.mrb[0].mxu0
  %v2007 = vadd.f32 %v1786, %v2006
  %v2008 = vpop.f32.mrb[0].mxu0
  %v2009 = vpop.f32.mrb[0].mxu0
  %v2010 = vadd.f32 %v1786, %v2009
  %v2011 = vpop.f32.mrb[0].mxu0
  %2012 = vmatprep.mubr.bf16.mxu0 %v1728
  %2013 = vmatmul.mubr.bf16.gmra.mrb[0].mxu0 %v1727
  %v2014 = vpop.f32.mrb[0].mxu0
  %v2015 = vadd.f32 %v1786, %v2014
  %v2016 = vpop.f32.mrb[0].mxu0
  %v2017 = vpop.f32.mrb[0].mxu0
  %v2018 = vadd.f32 %v1786, %v2017
  %v2019 = vpop.f32.mrb[0].mxu0
  %2020 = vmatprep.mubr.bf16.mxu0 %v1731
  %2021 = vmatmul.mubr.bf16.gmra.mrb[0].mxu0 %v1730
  %v2022 = vpop.f32.mrb[0].mxu0
  %v2023 = vadd.f32 %v1786, %v2022
  %v2024 = vpop.f32.mrb[0].mxu0
  %v2025 = vpop.f32.mrb[0].mxu0
  %v2026 = vadd.f32 %v1786, %v2025
  %v2027 = vpop.f32.mrb[0].mxu0
  %2028 = vdwg.mxu0
  %2029 = vmatprep.subr.bf16.mxu0 0
  %2030 = vmatpush1.bf16.msra.mxu0 %v1900
  %2031 = vmatprep.subr.bf16.mxu0 0
  %2032 = vmatpush1.bf16.msra.mxu0 %v1901
  %2033 = vmatprep.subr.bf16.mxu0 0
  %2034 = vmatpush1.bf16.msra.mxu0 %v1902
  %2035 = vmatprep.subr.bf16.mxu0 0
  %2036 = vmatpush1.bf16.msra.mxu0 %v1903
  %2037 = vmatprep.subr.bf16.mxu0 0
  %2038 = vmatpush1.bf16.msra.mxu0 %v1904
  %2039 = vmatprep.subr.bf16.mxu0 0
  %2040 = vmatpush1.bf16.msra.mxu0 %v1905
  %2041 = vmatprep.subr.bf16.mxu0 0
  %2042 = vmatpush1.bf16.msra.mxu0 %v1906
  %2043 = vmatprep.subr.bf16.mxu0 0
  %2044 = vmatpush1.bf16.msra.mxu0 %v1907
  %2045 = vmatprep.subr.bf16.mxu0 0
  %2046 = vmatpush1.bf16.msra.mxu0 0
  %2047 = vmatprep.subr.bf16.mxu0 0
  %2048 = vmatpush1.bf16.msra.mxu0 0
  %2049 = vmatprep.subr.bf16.mxu0 0
  %2050 = vmatpush1.bf16.msra.mxu0 0
  %2051 = vmatprep.subr.bf16.mxu0 0
  %2052 = vmatpush1.bf16.msra.mxu0 0
  %2053 = vmatprep.subr.bf16.mxu0 0
  %2054 = vmatpush1.bf16.msra.mxu0 0
  %2055 = vmatprep.subr.bf16.mxu0 0
  %2056 = vmatpush1.bf16.msra.mxu0 0
  %2057 = vmatprep.subr.bf16.mxu0 0
  %2058 = vmatpush1.bf16.msra.mxu0 0
  %2059 = vmatprep.subr.bf16.mxu0 0
  %2060 = vmatpush1.bf16.msra.mxu0 0
  %2061 = vmatprep.mubr.bf16.mxu0 0
  %2062 = vmatmul.mubr.bf16.gmra.mrb[0].mxu0 %v1711
  %v2063 = vpop.f32.mrb[0].mxu0
  %v2064 = vadd.f32 %v1967, %v2063
  %v2065 = vpop.f32.mrb[0].mxu0
  %v2066 = vpop.f32.mrb[0].mxu0
  %v2067 = vadd.f32 %v1970, %v2066
  %v2068 = vpop.f32.mrb[0].mxu0
  %2069 = vmatprep.mubr.bf16.mxu0 0
  %2070 = vmatmul.mubr.bf16.gmra.mrb[0].mxu0 %v1714
  %v2071 = vpop.f32.mrb[0].mxu0
  %v2072 = vadd.f32 %v1975, %v2071
  %v2073 = vpop.f32.mrb[0].mxu0
  %v2074 = vpop.f32.mrb[0].mxu0
  %v2075 = vadd.f32 %v1978, %v2074
  %v2076 = vpop.f32.mrb[0].mxu0
  %2077 = vmatprep.mubr.bf16.mxu0 0
  %2078 = vmatmul.mubr.bf16.gmra.mrb[0].mxu0 %v1717
  %v2079 = vpop.f32.mrb[0].mxu0
  %v2080 = vadd.f32 %v1983, %v2079
  %v2081 = vpop.f32.mrb[0].mxu0
  %v2082 = vpop.f32.mrb[0].mxu0
  %v2083 = vadd.f32 %v1986, %v2082
  %v2084 = vpop.f32.mrb[0].mxu0
  %2085 = vmatprep.mubr.bf16.mxu0 0
  %2086 = vmatmul.mubr.bf16.gmra.mrb[0].mxu0 %v1720
  %v2087 = vpop.f32.mrb[0].mxu0
  %v2088 = vadd.f32 %v1991, %v2087
  %v2089 = vpop.f32.mrb[0].mxu0
  %v2090 = vpop.f32.mrb[0].mxu0
  %v2091 = vadd.f32 %v1994, %v2090
  %v2092 = vpop.f32.mrb[0].mxu0
  %2093 = vmatprep.mubr.bf16.mxu0 0
  %2094 = vmatmul.mubr.bf16.gmra.mrb[0].mxu0 %v1723
  %v2095 = vpop.f32.mrb[0].mxu0
  %v2096 = vadd.f32 %v1999, %v2095
  %v2097 = vpop.f32.mrb[0].mxu0
  %v2098 = vpop.f32.mrb[0].mxu0
  %v2099 = vadd.f32 %v2002, %v2098
  %v2100 = vpop.f32.mrb[0].mxu0
  %2101 = vmatprep.mubr.bf16.mxu0 0
  %2102 = vmatmul.mubr.bf16.gmra.mrb[0].mxu0 %v1726
  %v2103 = vpop.f32.mrb[0].mxu0
  %v2104 = vadd.f32 %v2007, %v2103
  %v2105 = vpop.f32.mrb[0].mxu0
  %v2106 = vpop.f32.mrb[0].mxu0
  %v2107 = vadd.f32 %v2010, %v2106
  %v2108 = vpop.f32.mrb[0].mxu0
  %2109 = vmatprep.mubr.bf16.mxu0 0
  %2110 = vmatmul.mubr.bf16.gmra.mrb[0].mxu0 %v1729
  %v2111 = vpop.f32.mrb[0].mxu0
  %v2112 = vadd.f32 %v2015, %v2111
  %v2113 = vpop.f32.mrb[0].mxu0
  %v2114 = vpop.f32.mrb[0].mxu0
  %v2115 = vadd.f32 %v2018, %v2114
  %v2116 = vpop.f32.mrb[0].mxu0
  %2117 = vmatprep.mubr.bf16.mxu0 0
  %2118 = vmatmul.mubr.bf16.gmra.mrb[0].mxu0 %v1732
  %v2119 = vpop.f32.mrb[0].mxu0
  %v2120 = vadd.f32 %v2023, %v2119
  %v2121 = vpop.f32.mrb[0].mxu0
  %v2122 = vpop.f32.mrb[0].mxu0
  %v2123 = vadd.f32 %v2026, %v2122
  %v2124 = vpop.f32.mrb[0].mxu0
  %2125 = vdwg.mxu0
  %2126 = vrot.lane.b32.xlu0 %v59, 124
  %v2127 = vpop.permute.xlu0 %2126
  %2128 = vrot.lane.b32.xlu0 %v60, 124
  %v2129 = vpop.permute.xlu0 %2128
  %2130 = vrot.lane.b32.xlu0 %v61, 124
  %v2131 = vpop.permute.xlu0 %2130
  %2132 = vrot.lane.b32.xlu0 %v62, 124
  %v2133 = vpop.permute.xlu0 %2132
  %2134 = vrot.lane.b32.xlu0 %v63, 124
  %v2135 = vpop.permute.xlu0 %2134
  %2136 = vrot.lane.b32.xlu0 %v64, 124
  %v2137 = vpop.permute.xlu0 %2136
  %2138 = vrot.lane.b32.xlu0 %v65, 124
  %v2139 = vpop.permute.xlu0 %2138
  %2140 = vrot.lane.b32.xlu0 %v66, 124
  %v2141 = vpop.permute.xlu0 %2140
  %2142 = vrot.lane.b32.xlu0 %v67, 124
  %v2143 = vpop.permute.xlu0 %2142
  %2144 = vrot.lane.b32.xlu0 %v68, 124
  %v2145 = vpop.permute.xlu0 %2144
  %2146 = vrot.lane.b32.xlu0 %v69, 124
  %v2147 = vpop.permute.xlu0 %2146
  %2148 = vrot.lane.b32.xlu0 %v70, 124
  %v2149 = vpop.permute.xlu0 %2148
  %2150 = vrot.lane.b32.xlu0 %v71, 124
  %v2151 = vpop.permute.xlu0 %2150
  %2152 = vrot.lane.b32.xlu0 %v72, 124
  %v2153 = vpop.permute.xlu0 %2152
  %2154 = vrot.lane.b32.xlu0 %v73, 124
  %v2155 = vpop.permute.xlu0 %2154
  %2156 = vrot.lane.b32.xlu0 %v74, 124
  %v2157 = vpop.permute.xlu0 %2156
  %v2174 = vadd.f32 %v2064, %v2127
  %v2175 = vadd.f32 %v2067, %v2129
  %v2176 = vadd.f32 %v2072, %v2131
  %v2177 = vadd.f32 %v2075, %v2133
  %v2178 = vadd.f32 %v2080, %v2135
  %v2179 = vadd.f32 %v2083, %v2137
  %v2180 = vadd.f32 %v2088, %v2139
  %v2181 = vadd.f32 %v2091, %v2141
  %v2182 = vadd.f32 %v2096, %v2143
  %v2183 = vadd.f32 %v2099, %v2145
  %v2184 = vadd.f32 %v2104, %v2147
  %v2185 = vadd.f32 %v2107, %v2149
  %v2186 = vadd.f32 %v2112, %v2151
  %v2187 = vadd.f32 %v2115, %v2153
  %v2188 = vadd.f32 %v2120, %v2155
  %v2189 = vadd.f32 %v2123, %v2157
  %2190 = vrot.lane.b32.xlu0 %v59, 1
  %v2191 = vpop.permute.xlu0 %2190
  %2192 = vrot.lane.b32.xlu0 %v60, 1
  %v2193 = vpop.permute.xlu0 %2192
  %2194 = vrot.lane.b32.xlu0 %v61, 1
  %v2195 = vpop.permute.xlu0 %2194
  %2196 = vrot.lane.b32.xlu0 %v62, 1
  %v2197 = vpop.permute.xlu0 %2196
  %2198 = vrot.lane.b32.xlu0 %v63, 1
  %v2199 = vpop.permute.xlu0 %2198
  %2200 = vrot.lane.b32.xlu0 %v64, 1
  %v2201 = vpop.permute.xlu0 %2200
  %2202 = vrot.lane.b32.xlu0 %v65, 1
  %v2203 = vpop.permute.xlu0 %2202
  %2204 = vrot.lane.b32.xlu0 %v66, 1
  %v2205 = vpop.permute.xlu0 %2204
  %2206 = vrot.lane.b32.xlu0 %v67, 1
  %v2207 = vpop.permute.xlu0 %2206
  %2208 = vrot.lane.b32.xlu0 %v68, 1
  %v2209 = vpop.permute.xlu0 %2208
  %2210 = vrot.lane.b32.xlu0 %v69, 1
  %v2211 = vpop.permute.xlu0 %2210
  %2212 = vrot.lane.b32.xlu0 %v70, 1
  %v2213 = vpop.permute.xlu0 %2212
  %2214 = vrot.lane.b32.xlu0 %v71, 1
  %v2215 = vpop.permute.xlu0 %2214
  %2216 = vrot.lane.b32.xlu0 %v72, 1
  %v2217 = vpop.permute.xlu0 %2216
  %2218 = vrot.lane.b32.xlu0 %v73, 1
  %v2219 = vpop.permute.xlu0 %2218
  %2220 = vrot.lane.b32.xlu0 %v74, 1
  %v2221 = vpop.permute.xlu0 %2220
  %v2238 = vmul.f32 %v2064, %v2191
  %v2239 = vmul.f32 %v2067, %v2193
  %v2240 = vmul.f32 %v2072, %v2195
  %v2241 = vmul.f32 %v2075, %v2197
  %v2242 = vmul.f32 %v2080, %v2199
  %v2243 = vmul.f32 %v2083, %v2201
  %v2244 = vmul.f32 %v2088, %v2203
  %v2245 = vmul.f32 %v2091, %v2205
  %v2246 = vmul.f32 %v2096, %v2207
  %v2247 = vmul.f32 %v2099, %v2209
  %v2248 = vmul.f32 %v2104, %v2211
  %v2249 = vmul.f32 %v2107, %v2213
  %v2250 = vmul.f32 %v2112, %v2215
  %v2251 = vmul.f32 %v2115, %v2217
  %v2252 = vmul.f32 %v2120, %v2219
  %v2253 = vmul.f32 %v2123, %v2221
  %v2254 = vmul.f32 %v2064, %v59
  %v2255 = vmul.f32 %v2067, %v60
  %v2256 = vmul.f32 %v2072, %v61
  %v2257 = vmul.f32 %v2075, %v62
  %v2258 = vmul.f32 %v2080, %v63
  %v2259 = vmul.f32 %v2083, %v64
  %v2260 = vmul.f32 %v2088, %v65
  %v2261 = vmul.f32 %v2091, %v66
  %v2262 = vmul.f32 %v2096, %v67
  %v2263 = vmul.f32 %v2099, %v68
  %v2264 = vmul.f32 %v2104, %v69
  %v2265 = vmul.f32 %v2107, %v70
  %v2266 = vmul.f32 %v2112, %v71
  %v2267 = vmul.f32 %v2115, %v72
  %v2268 = vmul.f32 %v2120, %v73
  %v2269 = vmul.f32 %v2123, %v74
  %2286 = vrot.lane.b32.xlu0 %v2254, 127
  %v2287 = vpop.permute.xlu0 %2286
  %2288 = vrot.lane.b32.xlu0 %v2255, 127
  %v2289 = vpop.permute.xlu0 %2288
  %2290 = vrot.lane.b32.xlu0 %v2256, 127
  %v2291 = vpop.permute.xlu0 %2290
  %2292 = vrot.lane.b32.xlu0 %v2257, 127
  %v2293 = vpop.permute.xlu0 %2292
  %2294 = vrot.lane.b32.xlu0 %v2258, 127
  %v2295 = vpop.permute.xlu0 %2294
  %2296 = vrot.lane.b32.xlu0 %v2259, 127
  %v2297 = vpop.permute.xlu0 %2296
  %2298 = vrot.lane.b32.xlu0 %v2260, 127
  %v2299 = vpop.permute.xlu0 %2298
  %2300 = vrot.lane.b32.xlu0 %v2261, 127
  %v2301 = vpop.permute.xlu0 %2300
  %2302 = vrot.lane.b32.xlu0 %v2262, 127
  %v2303 = vpop.permute.xlu0 %2302
  %2304 = vrot.lane.b32.xlu0 %v2263, 127
  %v2305 = vpop.permute.xlu0 %2304
  %2306 = vrot.lane.b32.xlu0 %v2264, 127
  %v2307 = vpop.permute.xlu0 %2306
  %2308 = vrot.lane.b32.xlu0 %v2265, 127
  %v2309 = vpop.permute.xlu0 %2308
  %2310 = vrot.lane.b32.xlu0 %v2266, 127
  %v2311 = vpop.permute.xlu0 %2310
  %2312 = vrot.lane.b32.xlu0 %v2267, 127
  %v2313 = vpop.permute.xlu0 %2312
  %2314 = vrot.lane.b32.xlu0 %v2268, 127
  %v2315 = vpop.permute.xlu0 %2314
  %2316 = vrot.lane.b32.xlu0 %v2269, 127
  %v2317 = vpop.permute.xlu0 %2316
  %v2334 = vadd.f32 %v2238, %v2287
  %v2335 = vadd.f32 %v2239, %v2289
  %v2336 = vadd.f32 %v2240, %v2291
  %v2337 = vadd.f32 %v2241, %v2293
  %v2338 = vadd.f32 %v2242, %v2295
  %v2339 = vadd.f32 %v2243, %v2297
  %v2340 = vadd.f32 %v2244, %v2299
  %v2341 = vadd.f32 %v2245, %v2301
  %v2342 = vadd.f32 %v2246, %v2303
  %v2343 = vadd.f32 %v2247, %v2305
  %v2344 = vadd.f32 %v2248, %v2307
  %v2345 = vadd.f32 %v2249, %v2309
  %v2346 = vadd.f32 %v2250, %v2311
  %v2347 = vadd.f32 %v2251, %v2313
  %v2348 = vadd.f32 %v2252, %v2315
  %v2349 = vadd.f32 %v2253, %v2317
  %v2350 = vadd.f32 %v2334, %v2127
  %v2351 = vadd.f32 %v2335, %v2129
  %v2352 = vadd.f32 %v2336, %v2131
  %v2353 = vadd.f32 %v2337, %v2133
  %v2354 = vadd.f32 %v2338, %v2135
  %v2355 = vadd.f32 %v2339, %v2137
  %v2356 = vadd.f32 %v2340, %v2139
  %v2357 = vadd.f32 %v2341, %v2141
  %v2358 = vadd.f32 %v2342, %v2143
  %v2359 = vadd.f32 %v2343, %v2145
  %v2360 = vadd.f32 %v2344, %v2147
  %v2361 = vadd.f32 %v2345, %v2149
  %v2362 = vadd.f32 %v2346, %v2151
  %v2363 = vadd.f32 %v2347, %v2153
  %v2364 = vadd.f32 %v2348, %v2155
  %v2365 = vadd.f32 %v2349, %v2157
  %2366 = vrot.lane.b32.xlu0 %v59, 127
  %v2367 = vpop.permute.xlu0 %2366
  %2368 = vrot.lane.b32.xlu0 %v60, 127
  %v2369 = vpop.permute.xlu0 %2368
  %2370 = vrot.lane.b32.xlu0 %v61, 127
  %v2371 = vpop.permute.xlu0 %2370
  %2372 = vrot.lane.b32.xlu0 %v62, 127
  %v2373 = vpop.permute.xlu0 %2372
  %2374 = vrot.lane.b32.xlu0 %v63, 127
  %v2375 = vpop.permute.xlu0 %2374
  %2376 = vrot.lane.b32.xlu0 %v64, 127
  %v2377 = vpop.permute.xlu0 %2376
  %2378 = vrot.lane.b32.xlu0 %v65, 127
  %v2379 = vpop.permute.xlu0 %2378
  %2380 = vrot.lane.b32.xlu0 %v66, 127
  %v2381 = vpop.permute.xlu0 %2380
  %2382 = vrot.lane.b32.xlu0 %v67, 127
  %v2383 = vpop.permute.xlu0 %2382
  %2384 = vrot.lane.b32.xlu0 %v68, 127
  %v2385 = vpop.permute.xlu0 %2384
  %2386 = vrot.lane.b32.xlu0 %v69, 127
  %v2387 = vpop.permute.xlu0 %2386
  %2388 = vrot.lane.b32.xlu0 %v70, 127
  %v2389 = vpop.permute.xlu0 %2388
  %2390 = vrot.lane.b32.xlu0 %v71, 127
  %v2391 = vpop.permute.xlu0 %2390
  %2392 = vrot.lane.b32.xlu0 %v72, 127
  %v2393 = vpop.permute.xlu0 %2392
  %2394 = vrot.lane.b32.xlu0 %v73, 127
  %v2395 = vpop.permute.xlu0 %2394
  %2396 = vrot.lane.b32.xlu0 %v74, 127
  %v2397 = vpop.permute.xlu0 %2396
  %v2414 = vmul.f32 %v2064, %v2367
  %v2415 = vmul.f32 %v2067, %v2369
  %v2416 = vmul.f32 %v2072, %v2371
  %v2417 = vmul.f32 %v2075, %v2373
  %v2418 = vmul.f32 %v2080, %v2375
  %v2419 = vmul.f32 %v2083, %v2377
  %v2420 = vmul.f32 %v2088, %v2379
  %v2421 = vmul.f32 %v2091, %v2381
  %v2422 = vmul.f32 %v2096, %v2383
  %v2423 = vmul.f32 %v2099, %v2385
  %v2424 = vmul.f32 %v2104, %v2387
  %v2425 = vmul.f32 %v2107, %v2389
  %v2426 = vmul.f32 %v2112, %v2391
  %v2427 = vmul.f32 %v2115, %v2393
  %v2428 = vmul.f32 %v2120, %v2395
  %v2429 = vmul.f32 %v2123, %v2397
  %2446 = vrot.lane.b32.xlu0 %v2414, 127
  %v2447 = vpop.permute.xlu0 %2446
  %2448 = vrot.lane.b32.xlu0 %v2415, 127
  %v2449 = vpop.permute.xlu0 %2448
  %2450 = vrot.lane.b32.xlu0 %v2416, 127
  %v2451 = vpop.permute.xlu0 %2450
  %2452 = vrot.lane.b32.xlu0 %v2417, 127
  %v2453 = vpop.permute.xlu0 %2452
  %2454 = vrot.lane.b32.xlu0 %v2418, 127
  %v2455 = vpop.permute.xlu0 %2454
  %2456 = vrot.lane.b32.xlu0 %v2419, 127
  %v2457 = vpop.permute.xlu0 %2456
  %2458 = vrot.lane.b32.xlu0 %v2420, 127
  %v2459 = vpop.permute.xlu0 %2458
  %2460 = vrot.lane.b32.xlu0 %v2421, 127
  %v2461 = vpop.permute.xlu0 %2460
  %2462 = vrot.lane.b32.xlu0 %v2422, 127
  %v2463 = vpop.permute.xlu0 %2462
  %2464 = vrot.lane.b32.xlu0 %v2423, 127
  %v2465 = vpop.permute.xlu0 %2464
  %2466 = vrot.lane.b32.xlu0 %v2424, 127
  %v2467 = vpop.permute.xlu0 %2466
  %2468 = vrot.lane.b32.xlu0 %v2425, 127
  %v2469 = vpop.permute.xlu0 %2468
  %2470 = vrot.lane.b32.xlu0 %v2426, 127
  %v2471 = vpop.permute.xlu0 %2470
  %2472 = vrot.lane.b32.xlu0 %v2427, 127
  %v2473 = vpop.permute.xlu0 %2472
  %2474 = vrot.lane.b32.xlu0 %v2428, 127
  %v2475 = vpop.permute.xlu0 %2474
  %2476 = vrot.lane.b32.xlu0 %v2429, 127
  %v2477 = vpop.permute.xlu0 %2476
  %v2494 = vadd.f32 %v2254, %v2447
  %v2495 = vadd.f32 %v2255, %v2449
  %v2496 = vadd.f32 %v2256, %v2451
  %v2497 = vadd.f32 %v2257, %v2453
  %v2498 = vadd.f32 %v2258, %v2455
  %v2499 = vadd.f32 %v2259, %v2457
  %v2500 = vadd.f32 %v2260, %v2459
  %v2501 = vadd.f32 %v2261, %v2461
  %v2502 = vadd.f32 %v2262, %v2463
  %v2503 = vadd.f32 %v2263, %v2465
  %v2504 = vadd.f32 %v2264, %v2467
  %v2505 = vadd.f32 %v2265, %v2469
  %v2506 = vadd.f32 %v2266, %v2471
  %v2507 = vadd.f32 %v2267, %v2473
  %v2508 = vadd.f32 %v2268, %v2475
  %v2509 = vadd.f32 %v2269, %v2477
  %2510 = vrot.lane.b32.xlu0 %v59, 123
  %v2511 = vpop.permute.xlu0 %2510
  %2512 = vrot.lane.b32.xlu0 %v60, 123
  %v2513 = vpop.permute.xlu0 %2512
  %2514 = vrot.lane.b32.xlu0 %v61, 123
  %v2515 = vpop.permute.xlu0 %2514
  %2516 = vrot.lane.b32.xlu0 %v62, 123
  %v2517 = vpop.permute.xlu0 %2516
  %2518 = vrot.lane.b32.xlu0 %v63, 123
  %v2519 = vpop.permute.xlu0 %2518
  %2520 = vrot.lane.b32.xlu0 %v64, 123
  %v2521 = vpop.permute.xlu0 %2520
  %2522 = vrot.lane.b32.xlu0 %v65, 123
  %v2523 = vpop.permute.xlu0 %2522
  %2524 = vrot.lane.b32.xlu0 %v66, 123
  %v2525 = vpop.permute.xlu0 %2524
  %2526 = vrot.lane.b32.xlu0 %v67, 123
  %v2527 = vpop.permute.xlu0 %2526
  %2528 = vrot.lane.b32.xlu0 %v68, 123
  %v2529 = vpop.permute.xlu0 %2528
  %2530 = vrot.lane.b32.xlu0 %v69, 123
  %v2531 = vpop.permute.xlu0 %2530
  %2532 = vrot.lane.b32.xlu0 %v70, 123
  %v2533 = vpop.permute.xlu0 %2532
  %2534 = vrot.lane.b32.xlu0 %v71, 123
  %v2535 = vpop.permute.xlu0 %2534
  %2536 = vrot.lane.b32.xlu0 %v72, 123
  %v2537 = vpop.permute.xlu0 %2536
  %2538 = vrot.lane.b32.xlu0 %v73, 123
  %v2539 = vpop.permute.xlu0 %2538
  %2540 = vrot.lane.b32.xlu0 %v74, 123
  %v2541 = vpop.permute.xlu0 %2540
  %v2558 = vadd.f32 %v2494, %v2511
  %v2559 = vadd.f32 %v2495, %v2513
  %v2560 = vadd.f32 %v2496, %v2515
  %v2561 = vadd.f32 %v2497, %v2517
  %v2562 = vadd.f32 %v2498, %v2519
  %v2563 = vadd.f32 %v2499, %v2521
  %v2564 = vadd.f32 %v2500, %v2523
  %v2565 = vadd.f32 %v2501, %v2525
  %v2566 = vadd.f32 %v2502, %v2527
  %v2567 = vadd.f32 %v2503, %v2529
  %v2568 = vadd.f32 %v2504, %v2531
  %v2569 = vadd.f32 %v2505, %v2533
  %v2570 = vadd.f32 %v2506, %v2535
  %v2571 = vadd.f32 %v2507, %v2537
  %v2572 = vadd.f32 %v2508, %v2539
  %v2573 = vadd.f32 %v2509, %v2541
  %vm2574 = vcmp.eq.s32.totalorder %v76, 0
  %vm2575 = vcmp.eq.s32.totalorder %v76, 1
  %vm2576 = vcmp.eq.s32.totalorder %v76, 2
  %v2577 = vsel %vm2576, 1, 0
  %vm2578 = vcmp.eq.s32.totalorder %v2577, 1
  %2580 = vset.pattern.permute.xlu0 1
  %2581 = vperm.xlu0 %2580, %v2558
  %v2582 = vpop.permute.xlu0 %2581
  %2585 = vset.pattern.permute.xlu0 1
  %2586 = vperm.xlu0 %2585, %v2559
  %v2587 = vpop.permute.xlu0 %2586
  %2590 = vset.pattern.permute.xlu0 1
  %2591 = vperm.xlu0 %2590, %v2560
  %v2592 = vpop.permute.xlu0 %2591
  %2595 = vset.pattern.permute.xlu0 1
  %2596 = vperm.xlu0 %2595, %v2561
  %v2597 = vpop.permute.xlu0 %2596
  %2600 = vset.pattern.permute.xlu0 1
  %2601 = vperm.xlu0 %2600, %v2562
  %v2602 = vpop.permute.xlu0 %2601
  %2605 = vset.pattern.permute.xlu0 1
  %2606 = vperm.xlu0 %2605, %v2563
  %v2607 = vpop.permute.xlu0 %2606
  %2610 = vset.pattern.permute.xlu0 1
  %2611 = vperm.xlu0 %2610, %v2564
  %v2612 = vpop.permute.xlu0 %2611
  %2615 = vset.pattern.permute.xlu0 1
  %2616 = vperm.xlu0 %2615, %v2565
  %v2617 = vpop.permute.xlu0 %2616
  %2620 = vset.pattern.permute.xlu0 1
  %2621 = vperm.xlu0 %2620, %v2566
  %v2622 = vpop.permute.xlu0 %2621
  %2625 = vset.pattern.permute.xlu0 1
  %2626 = vperm.xlu0 %2625, %v2567
  %v2627 = vpop.permute.xlu0 %2626
  %2630 = vset.pattern.permute.xlu0 1
  %2631 = vperm.xlu0 %2630, %v2568
  %v2632 = vpop.permute.xlu0 %2631
  %2635 = vset.pattern.permute.xlu0 1
  %2636 = vperm.xlu0 %2635, %v2569
  %v2637 = vpop.permute.xlu0 %2636
  %2640 = vset.pattern.permute.xlu0 1
  %2641 = vperm.xlu0 %2640, %v2570
  %v2642 = vpop.permute.xlu0 %2641
  %2645 = vset.pattern.permute.xlu0 1
  %2646 = vperm.xlu0 %2645, %v2571
  %v2647 = vpop.permute.xlu0 %2646
  %2650 = vset.pattern.permute.xlu0 1
  %2651 = vperm.xlu0 %2650, %v2572
  %v2652 = vpop.permute.xlu0 %2651
  %2655 = vset.pattern.permute.xlu0 1
  %2656 = vperm.xlu0 %2655, %v2573
  %v2657 = vpop.permute.xlu0 %2656
  %v2659 = vsel %vm2578, %v2582, 0.0
  %v2660 = vsel %vm2578, %v2587, 0.0
  %v2661 = vsel %vm2578, %v2592, 0.0
  %v2662 = vsel %vm2578, %v2597, 0.0
  %v2663 = vsel %vm2578, %v2602, 0.0
  %v2664 = vsel %vm2578, %v2607, 0.0
  %v2665 = vsel %vm2578, %v2612, 0.0
  %v2666 = vsel %vm2578, %v2617, 0.0
  %v2667 = vsel %vm2578, %v2622, 0.0
  %v2668 = vsel %vm2578, %v2627, 0.0
  %v2669 = vsel %vm2578, %v2632, 0.0
  %v2670 = vsel %vm2578, %v2637, 0.0
  %v2671 = vsel %vm2578, %v2642, 0.0
  %v2672 = vsel %vm2578, %v2647, 0.0
  %v2673 = vsel %vm2578, %v2652, 0.0
  %v2674 = vsel %vm2578, %v2657, 0.0
  %v2675 = vsel %vm2575, 1, 0
  %vm2676 = vcmp.eq.s32.totalorder %v2675, 1
  %2678 = vset.pattern.permute.xlu0 1
  %2679 = vperm.xlu0 %2678, %v2350
  %v2680 = vpop.permute.xlu0 %2679
  %2683 = vset.pattern.permute.xlu0 1
  %2684 = vperm.xlu0 %2683, %v2351
  %v2685 = vpop.permute.xlu0 %2684
  %2688 = vset.pattern.permute.xlu0 1
  %2689 = vperm.xlu0 %2688, %v2352
  %v2690 = vpop.permute.xlu0 %2689
  %2693 = vset.pattern.permute.xlu0 1
  %2694 = vperm.xlu0 %2693, %v2353
  %v2695 = vpop.permute.xlu0 %2694
  %2698 = vset.pattern.permute.xlu0 1
  %2699 = vperm.xlu0 %2698, %v2354
  %v2700 = vpop.permute.xlu0 %2699
  %2703 = vset.pattern.permute.xlu0 1
  %2704 = vperm.xlu0 %2703, %v2355
  %v2705 = vpop.permute.xlu0 %2704
  %2708 = vset.pattern.permute.xlu0 1
  %2709 = vperm.xlu0 %2708, %v2356
  %v2710 = vpop.permute.xlu0 %2709
  %2713 = vset.pattern.permute.xlu0 1
  %2714 = vperm.xlu0 %2713, %v2357
  %v2715 = vpop.permute.xlu0 %2714
  %2718 = vset.pattern.permute.xlu0 1
  %2719 = vperm.xlu0 %2718, %v2358
  %v2720 = vpop.permute.xlu0 %2719
  %2723 = vset.pattern.permute.xlu0 1
  %2724 = vperm.xlu0 %2723, %v2359
  %v2725 = vpop.permute.xlu0 %2724
  %2728 = vset.pattern.permute.xlu0 1
  %2729 = vperm.xlu0 %2728, %v2360
  %v2730 = vpop.permute.xlu0 %2729
  %2733 = vset.pattern.permute.xlu0 1
  %2734 = vperm.xlu0 %2733, %v2361
  %v2735 = vpop.permute.xlu0 %2734
  %2738 = vset.pattern.permute.xlu0 1
  %2739 = vperm.xlu0 %2738, %v2362
  %v2740 = vpop.permute.xlu0 %2739
  %2743 = vset.pattern.permute.xlu0 1
  %2744 = vperm.xlu0 %2743, %v2363
  %v2745 = vpop.permute.xlu0 %2744
  %2748 = vset.pattern.permute.xlu0 1
  %2749 = vperm.xlu0 %2748, %v2364
  %v2750 = vpop.permute.xlu0 %2749
  %2753 = vset.pattern.permute.xlu0 1
  %2754 = vperm.xlu0 %2753, %v2365
  %v2755 = vpop.permute.xlu0 %2754
  %v2757 = vsel %vm2676, %v2680, %v2659
  %v2758 = vsel %vm2676, %v2685, %v2660
  %v2759 = vsel %vm2676, %v2690, %v2661
  %v2760 = vsel %vm2676, %v2695, %v2662
  %v2761 = vsel %vm2676, %v2700, %v2663
  %v2762 = vsel %vm2676, %v2705, %v2664
  %v2763 = vsel %vm2676, %v2710, %v2665
  %v2764 = vsel %vm2676, %v2715, %v2666
  %v2765 = vsel %vm2676, %v2720, %v2667
  %v2766 = vsel %vm2676, %v2725, %v2668
  %v2767 = vsel %vm2676, %v2730, %v2669
  %v2768 = vsel %vm2676, %v2735, %v2670
  %v2769 = vsel %vm2676, %v2740, %v2671
  %v2770 = vsel %vm2676, %v2745, %v2672
  %v2771 = vsel %vm2676, %v2750, %v2673
  %v2772 = vsel %vm2676, %v2755, %v2674
  %v2773 = vsel %vm2574, 1, 0
  %vm2774 = vcmp.eq.s32.totalorder %v2773, 1
  %2776 = vset.pattern.permute.xlu0 0
  %2777 = vperm.xlu0 %2776, %v2174
  %v2778 = vpop.permute.xlu0 %2777
  %2781 = vset.pattern.permute.xlu0 0
  %2782 = vperm.xlu0 %2781, %v2175
  %v2783 = vpop.permute.xlu0 %2782
  %2786 = vset.pattern.permute.xlu0 0
  %2787 = vperm.xlu0 %2786, %v2176
  %v2788 = vpop.permute.xlu0 %2787
  %2791 = vset.pattern.permute.xlu0 0
  %2792 = vperm.xlu0 %2791, %v2177
  %v2793 = vpop.permute.xlu0 %2792
  %2796 = vset.pattern.permute.xlu0 0
  %2797 = vperm.xlu0 %2796, %v2178
  %v2798 = vpop.permute.xlu0 %2797
  %2801 = vset.pattern.permute.xlu0 0
  %2802 = vperm.xlu0 %2801, %v2179
  %v2803 = vpop.permute.xlu0 %2802
  %2806 = vset.pattern.permute.xlu0 0
  %2807 = vperm.xlu0 %2806, %v2180
  %v2808 = vpop.permute.xlu0 %2807
  %2811 = vset.pattern.permute.xlu0 0
  %2812 = vperm.xlu0 %2811, %v2181
  %v2813 = vpop.permute.xlu0 %2812
  %2816 = vset.pattern.permute.xlu0 0
  %2817 = vperm.xlu0 %2816, %v2182
  %v2818 = vpop.permute.xlu0 %2817
  %2821 = vset.pattern.permute.xlu0 0
  %2822 = vperm.xlu0 %2821, %v2183
  %v2823 = vpop.permute.xlu0 %2822
  %2826 = vset.pattern.permute.xlu0 0
  %2827 = vperm.xlu0 %2826, %v2184
  %v2828 = vpop.permute.xlu0 %2827
  %2831 = vset.pattern.permute.xlu0 0
  %2832 = vperm.xlu0 %2831, %v2185
  %v2833 = vpop.permute.xlu0 %2832
  %2836 = vset.pattern.permute.xlu0 0
  %2837 = vperm.xlu0 %2836, %v2186
  %v2838 = vpop.permute.xlu0 %2837
  %2841 = vset.pattern.permute.xlu0 0
  %2842 = vperm.xlu0 %2841, %v2187
  %v2843 = vpop.permute.xlu0 %2842
  %2846 = vset.pattern.permute.xlu0 0
  %2847 = vperm.xlu0 %2846, %v2188
  %v2848 = vpop.permute.xlu0 %2847
  %2851 = vset.pattern.permute.xlu0 0
  %2852 = vperm.xlu0 %2851, %v2189
  %v2853 = vpop.permute.xlu0 %2852
  %v2855 = vsel %vm2774, %v2778, %v2757
  %v2856 = vsel %vm2774, %v2783, %v2758
  %v2857 = vsel %vm2774, %v2788, %v2759
  %v2858 = vsel %vm2774, %v2793, %v2760
  %v2859 = vsel %vm2774, %v2798, %v2761
  %v2860 = vsel %vm2774, %v2803, %v2762
  %v2861 = vsel %vm2774, %v2808, %v2763
  %v2862 = vsel %vm2774, %v2813, %v2764
  %v2863 = vsel %vm2774, %v2818, %v2765
  %v2864 = vsel %vm2774, %v2823, %v2766
  %v2865 = vsel %vm2774, %v2828, %v2767
  %v2866 = vsel %vm2774, %v2833, %v2768
  %v2867 = vsel %vm2774, %v2838, %v2769
  %v2868 = vsel %vm2774, %v2843, %v2770
  %v2869 = vsel %vm2774, %v2848, %v2771
  %v2870 = vsel %vm2774, %v2853, %v2772
  %2871 = vst [vmem:[%s7] sm:$0xff] %v2855
  %2872 = vst [vmem:[%s7 + $0x8] sm:$0xff] %v2856
  %2873 = vst [vmem:[%s7 + $0x10] sm:$0xff] %v2857
  %2874 = vst [vmem:[%s7 + $0x18] sm:$0xff] %v2858
  %2875 = vst [vmem:[%s7 + $0x20] sm:$0xff] %v2859
  %2876 = vst [vmem:[%s7 + $0x28] sm:$0xff] %v2860
  %2877 = vst [vmem:[%s7 + $0x30] sm:$0xff] %v2861
  %2878 = vst [vmem:[%s7 + $0x38] sm:$0xff] %v2862
  %2879 = vst [vmem:[%s7 + $0x40] sm:$0xff] %v2863
  %2880 = vst [vmem:[%s7 + $0x48] sm:$0xff] %v2864
  %2881 = vst [vmem:[%s7 + $0x50] sm:$0xff] %v2865
  %2882 = vst [vmem:[%s7 + $0x58] sm:$0xff] %v2866
  %2883 = vst [vmem:[%s7 + $0x60] sm:$0xff] %v2867
  %2884 = vst [vmem:[%s7 + $0x68] sm:$0xff] %v2868
  %2885 = vst [vmem:[%s7 + $0x70] sm:$0xff] %v2869
  %2886 = vst [vmem:[%s7 + $0x78] sm:$0xff] %v2870
  // Predicated region
  $region30: #{rot_navier_forward.1} parent=0 // pred_check
    _
  $region31: #{rot_navier_forward.1} parent=0 // pred_check_branch
    %2888 = sbr.rel (0) target = $region33
  $region32: #{rot_navier_forward.1} parent=0 // pred_region
    _
  $region33: #{rot_navier_forward.1} parent=0 // pred_fallthru
    _
  // Predicated region
  $region34: #{rot_navier_forward.1} parent=0 // pred_check
    _
  $region35: #{rot_navier_forward.1} parent=0 // pred_check_branch
    %2890 = sbr.rel (0) target = $region37
  $region36: #{rot_navier_forward.1} parent=0 // pred_region
    _
  $region37: #{rot_navier_forward.1} parent=0 // pred_fallthru
    _

</llo_original>
